<compile_context>
chip_gen: v7x
topology: tpu7x:2x2x1
jax: 0.10.0
libtpu: 0.0.40
codegen_flags: <defaults>
</compile_context>

<pallas_src>
import functools
import math

import jax
import jax.numpy as jnp
from jax.experimental import pallas as pl
from jax.experimental.pallas import tpu as pltpu


# 40 MiB scoped VMEM: above the 16/32 MiB defaults, comfortable headroom under
# v7x's 64 MiB physical VMEM (per perf review).
_VMEM_LIMIT_BYTES = 40 * 1024 * 1024


def _l2norm(x, axis=-1):
    # F.normalize(p=2, eps=1e-12) semantics: x / max(||x||_2, 1e-12)
    n = jnp.sqrt(jnp.sum(x * x, axis=axis, keepdims=True))
    return x / jnp.maximum(n, 1e-12)


def _frames_per_block(n_frames, hw, target_rows=512):
    """Frames per self-attention grid step (amortize per-step overhead)."""
    fpb = max(1, min(n_frames, target_rows // max(hw, 1)))
    while n_frames % fpb:
        fpb -= 1
    return fpb


def _pick_query_tile(hw, cap=256):
    """In-frame query tile: hw itself if small, else a 128-multiple divisor."""
    if hw <= cap:
        return hw
    t = (cap // 128) * 128
    while t >= 128:
        if hw % t == 0:
            return t
        t -= 128
    return hw  # fallback: whole frame (correctness over tiling)


# ---------------------------------------------------------------------------
# Self-attention (GraphAttention, no mask) fused with residual add and
# InstanceNorm2d(affine=False, eps=1e-5).
#   grid = (S, F // fpb); per step we process fpb query frames.
#   k_ref : (1, N, kd)      pre-projected, L2-normalized keys (== queries), bf16
#   v_ref : (F, 1, c, hw)   raw tgt in native channel-major layout (values), bf16
#   r_ref : (fpb, 1, c, hw) raw tgt rows for this step (residual), bf16
#   o_ref : (fpb, 1, c, hw) normalized output, bf16 (native layout)
# ---------------------------------------------------------------------------
def _self_attn_norm_kernel(k_ref, v_ref, r_ref, o_ref, *, hw, n_frames, fpb,
                           inv_tau, eps):
    i = pl.program_id(1)
    k_all = k_ref[0]                                      # (N, kd) bf16

    for lf in range(fpb):                                 # static unroll
        start = i * (fpb * hw) + lf * hw
        if hw % 8 == 0:
            start = pl.multiple_of(start, 8)
        # Query tile for this frame: sliced from the resident key block
        # (no extra DMA; queries == keys for self-attention).
        q_lf = k_ref[0, pl.ds(start, hw), :]              # (hw, kd) bf16

        # Transposed scores (keys on sublane, queries on lane): (N, hw), f32.
        scores = jax.lax.dot_general(
            k_all, q_lf, (((1,), (1,)), ((), ())),
            preferred_element_type=jnp.float32) * inv_tau

        m = jnp.max(scores, axis=0, keepdims=True)        # (1, hw)
        p = jnp.exp(scores - m)                           # (N, hw)
        denom = jnp.sum(p, axis=0, keepdims=True)         # (1, hw)
        p_b = p.astype(jnp.bfloat16)

        # attn^T (c, hw) accumulated per key frame from the native-layout value
        # (avoids any host-side token transpose of the c-dim features).
        acc = None
        for kf in range(n_frames):                        # static unroll
            v_kf = v_ref[kf, 0]                           # (c, hw) bf16
            p_kf = p_b[kf * hw:(kf + 1) * hw, :]          # (hw, hw)
            term = jax.lax.dot_general(
                v_kf, p_kf, (((1,), (0,)), ((), ())),
                preferred_element_type=jnp.float32)       # (c, hw)
            acc = term if acc is None else acc + term

        attn = acc * pl.reciprocal(denom)                 # exact recip on (1, hw)

        # Residual + InstanceNorm over the spatial (hw) axis, biased variance.
        x = r_ref[lf, 0].astype(jnp.float32) + attn       # (c, hw)
        mean = jnp.mean(x, axis=1, keepdims=True)
        xc = x - mean
        var = jnp.mean(xc * xc, axis=1, keepdims=True)
        o_ref[lf, 0] = (xc * jax.lax.rsqrt(var + eps)).astype(o_ref.dtype)


def self_attention_with_norm(k_tok, tgt_nat, *, hw, inv_tau, eps):
    """k_tok: (S, N, kd) bf16; tgt_nat: (F, S, c, hw) bf16 -> (F, S, c, hw) bf16."""
    S, N, kd = k_tok.shape
    F_, _, c, _ = tgt_nat.shape
    fpb = _frames_per_block(F_, hw)
    grid = (S, F_ // fpb)

    kernel = functools.partial(_self_attn_norm_kernel, hw=hw, n_frames=F_,
                               fpb=fpb, inv_tau=inv_tau, eps=eps)
    return pl.pallas_call(
        kernel,
        out_shape=jax.ShapeDtypeStruct((F_, S, c, hw), jnp.bfloat16),
        grid=grid,
        in_specs=[
            pl.BlockSpec((1, N, kd), lambda s, i: (s, 0, 0)),        # keys (resident per s)
            pl.BlockSpec((F_, 1, c, hw), lambda s, i: (0, s, 0, 0)), # values (native, resident)
            pl.BlockSpec((fpb, 1, c, hw), lambda s, i: (i, s, 0, 0)),# residual rows
        ],
        out_specs=pl.BlockSpec((fpb, 1, c, hw), lambda s, i: (i, s, 0, 0)),
        compiler_params=pltpu.CompilerParams(
            dimension_semantics=("parallel", "parallel"),
            vmem_limit_bytes=_VMEM_LIMIT_BYTES),
    )(k_tok, tgt_nat, tgt_nat)


# ---------------------------------------------------------------------------
# Masked cross-attention (MaskedGraphAttention).
#   grid = (S, F_query, hw // tq); mask == "key frame != query frame".
#   q_ref : (1, 1, tq, dq)  pre-projected, normalized, 1/tau-folded query tile
#   k_ref : (1, N, dq)      pre-projected, normalized keys (resident per s)
#   v_ref : (F, 1, cv, hw)  pos_enc in native layout (resident per s)
#   o_ref : (1, 1, cv, tq)  final output tile, written in native layout
# ---------------------------------------------------------------------------
def _cross_attn_kernel(q_ref, k_ref, v_ref, o_ref, *, hw, n_frames,
                       apply_sigmoid):
    qf = pl.program_id(1)                                 # query frame index
    q = q_ref[0, 0]                                       # (tq, dq) bf16
    k = k_ref[0]                                          # (N, dq) bf16

    # Transposed scores (N keys x tq queries), f32 accumulation.
    scores = jax.lax.dot_general(
        k, q, (((1,), (1,)), ((), ())),
        preferred_element_type=jnp.float32)               # (N, tq)

    # Frame mask rebuilt in-kernel: scalar compare against the query frame id.
    n_keys = scores.shape[0]
    key_frame = jax.lax.broadcasted_iota(jnp.int32, (n_keys, 1), 0) // hw
    scores = jnp.where(key_frame == qf, -jnp.inf, scores)

    m = jnp.max(scores, axis=0, keepdims=True)            # (1, tq)
    p = jnp.exp(scores - m)                               # (N, tq)
    denom = jnp.sum(p, axis=0, keepdims=True)             # (1, tq)
    p_b = p.astype(jnp.bfloat16)

    # out^T (cv, tq) accumulated per key frame from the native-layout values.
    acc = None
    for kf in range(n_frames):                            # static unroll
        v_kf = v_ref[kf, 0]                               # (cv, hw) bf16
        p_kf = p_b[kf * hw:(kf + 1) * hw, :]              # (hw, tq)
        term = jax.lax.dot_general(
            v_kf, p_kf, (((1,), (0,)), ((), ())),
            preferred_element_type=jnp.float32)           # (cv, tq)
        acc = term if acc is None else acc + term

    out = acc * pl.reciprocal(denom)                      # deferred softmax norm
    if apply_sigmoid:
        out = jax.nn.sigmoid(out)
    o_ref[0, 0] = out.astype(o_ref.dtype)


def masked_cross_attention(q_nat, k_tok, v_nat, *, hw, apply_sigmoid):
    """q_nat: (F, S, hw, dq) bf16; k_tok: (S, N, dq) bf16; v_nat: (F, S, cv, hw)
    bf16 -> (F, S, cv, hw) f32 (final module output layout)."""
    F_, S, _, dq = q_nat.shape
    _, N, _ = k_tok.shape
    cv = v_nat.shape[2]
    tq = _pick_query_tile(hw)
    grid = (S, F_, hw // tq)

    kernel = functools.partial(_cross_attn_kernel, hw=hw, n_frames=F_,
                               apply_sigmoid=apply_sigmoid)
    return pl.pallas_call(
        kernel,
        out_shape=jax.ShapeDtypeStruct((F_, S, cv, hw), jnp.float32),
        grid=grid,
        in_specs=[
            pl.BlockSpec((1, 1, tq, dq), lambda s, f, j: (f, s, j, 0)),   # query tile
            pl.BlockSpec((1, N, dq), lambda s, f, j: (s, 0, 0)),          # keys (resident per s)
            pl.BlockSpec((F_, 1, cv, hw), lambda s, f, j: (0, s, 0, 0)),  # values (native, resident)
        ],
        out_specs=pl.BlockSpec((1, 1, cv, tq), lambda s, f, j: (f, s, 0, j)),
        compiler_params=pltpu.CompilerParams(
            dimension_semantics=("parallel", "parallel", "parallel"),
            vmem_limit_bytes=_VMEM_LIMIT_BYTES),
    )(q_nat, k_tok, v_nat)


# ---------------------------------------------------------------------------
# Module wrapper
# ---------------------------------------------------------------------------
class MaskedLPropDecoderLayerPallas:
    def __init__(self, feature_dim, key_dim, lprop_mode, seed=0):
        self.feature_dim = feature_dim
        self.key_dim = key_dim
        self.lprop_mode = lprop_mode
        self.tau = 1.0 / 30.0

        if lprop_mode != 3:
            k_cross, k_self = jax.random.split(jax.random.PRNGKey(seed + 1))
            std = math.sqrt(2.0 / key_dim)
            # Stored pre-transposed: (feature_dim, key_dim) == W_K^T, bias zero.
            self.cross_wk_t = jax.random.normal(
                k_cross, (feature_dim, key_dim), jnp.float32) * std
            self.cross_bk = jnp.zeros((key_dim,), jnp.float32)
            self.self_wk_t = jax.random.normal(
                k_self, (feature_dim, key_dim), jnp.float32) * std
            self.self_bk = jnp.zeros((key_dim,), jnp.float32)
        else:
            # no_learning mode: projections unused.
            self.cross_wk_t = None
            self.cross_bk = None
        # NOTE: the PyTorch module also creates WV but never uses it in forward().

    def __call__(self, tgt, memory, pos_enc):
        # tgt, memory: (F, S, c, h, w); pos_enc: (F, S, ce, h, w)
        F_, S, c, h, w = tgt.shape
        cv = pos_enc.shape[2]
        hw = h * w
        N = F_ * hw
        inv_tau = 1.0 / self.tau
        # NOTE: F_ == 1 makes every cross-attention row fully masked -> NaN,
        # matching the reference PyTorch behaviour.
        # TODO(synk): hw % 8 != 0 is supported only via slower unaligned slices.

        # Native channel-major layouts (reshape of the minor dims only: free).
        tgt_nat = tgt.reshape(F_, S, c, hw)
        mem_nat = memory.reshape(F_, S, c, hw)
        pos_nat = pos_enc.reshape(F_, S, cv, hw).astype(jnp.bfloat16)

        def proj_norm(x_nat, wt, b):
            # Project + L2-normalize in native layout: (F,S,C,hw) -> (F,S,hw,kd).
            p = jnp.einsum('fscn,ck->fsnk', x_nat.astype(jnp.float32), wt) + b
            return _l2norm(p, axis=-1)

        def to_tok(x):
            # (F, S, hw, d) -> (S, N, d); only the small kd-wide arrays are
            # ever transposed on the host.
            Fh, Sh, hwh, dh = x.shape
            return x.transpose(1, 0, 2, 3).reshape(Sh, Fh * hwh, dh)

        if self.lprop_mode != 3:
            # --- fused self-attention + residual + InstanceNorm2d --------------
            qk_self = proj_norm(tgt_nat, self.self_wk_t, self.self_bk)
            k_self_tok = to_tok(qk_self).astype(jnp.bfloat16)         # (S, N, kd)
            tgt_nat_b = tgt_nat.astype(jnp.bfloat16)                  # values + residual
            self_out = self_attention_with_norm(
                k_self_tok, tgt_nat_b, hw=hw, inv_tau=inv_tau, eps=1e-5)

            # --- masked cross-attention inputs (projected, normalized, bf16) ---
            q_cross = (proj_norm(self_out, self.cross_wk_t, self.cross_bk)
                       * inv_tau).astype(jnp.bfloat16)                # (F, S, hw, kd)
            k_cross = to_tok(
                proj_norm(mem_nat, self.cross_wk_t, self.cross_bk)
            ).astype(jnp.bfloat16)                                    # (S, N, kd)
        else:
            # no_learning: raw features, L2-normalized over the channel dim.
            qn = _l2norm(tgt_nat.astype(jnp.float32), axis=2)         # (F, S, c, hw)
            q_cross = (jnp.swapaxes(qn, 2, 3) * inv_tau).astype(jnp.bfloat16)
            kn = _l2norm(mem_nat.astype(jnp.float32), axis=2)
            k_cross = kn.transpose(1, 0, 3, 2).reshape(S, N, c).astype(jnp.bfloat16)

        # Masked cross-attention writes the final (F, S, cv, hw) result directly
        # (no output transpose pass); sigmoid fused when lprop_mode != 3.
        out_nat = masked_cross_attention(
            q_cross, k_cross, pos_nat, hw=hw,
            apply_sigmoid=(self.lprop_mode != 3))

        return out_nat.reshape(F_, S, cv, h, w)


if __name__ == "__main__":
    F_, S, c, ce, h, w = 2, 2, 32, 16, 8, 8
    key_dim = 16

    key = jax.random.PRNGKey(0)
    k1, k2, k3 = jax.random.split(key, 3)
    tgt = jax.random.normal(k1, (F_, S, c, h, w), jnp.float32)
    memory = jax.random.normal(k2, (F_, S, c, h, w), jnp.float32)
    pos_enc = jax.random.normal(k3, (F_, S, ce, h, w), jnp.float32)

    layer = MaskedLPropDecoderLayerPallas(feature_dim=c, key_dim=key_dim,
                                          lprop_mode=1, seed=0)
    out = layer(tgt, memory, pos_enc)
    out = jax.block_until_ready(out)
    assert out.shape == (F_, S, ce, h, w), out.shape
    assert bool(jnp.all(jnp.isfinite(out)))
    print("KERNEL_OK")
</pallas_src>

<mosaic_0001>
module attributes {stable_mosaic.version = 11 : i64} {
  func.func @_self_attn_norm_kernel(%arg0: i32, %arg1: i32, %arg2: memref<1x128x16xbf16, #tpu.memory_space<vmem>>, %arg3: memref<2x1x32x64xbf16, #tpu.memory_space<vmem>>, %arg4: memref<2x1x32x64xbf16, #tpu.memory_space<vmem>>, %arg5: memref<2x1x32x64xbf16, #tpu.memory_space<vmem>>) attributes {dimension_semantics = [#tpu.dimension_semantics<parallel>, #tpu.dimension_semantics<parallel>], iteration_bounds = array<i64: 2, 1>, scalar_prefetch = 0 : i64, scratch_operands = 0 : i64, tpu.core_type = #tpu.core_type<tc>, window_params = [{transform_indices = @transform_0, window_bounds = array<i64: 1, 128, 16>}, {transform_indices = @transform_1, window_bounds = array<i64: 2, 1, 32, 64>}, {transform_indices = @transform_2, window_bounds = array<i64: 2, 1, 32, 64>}, {transform_indices = @transform_3, window_bounds = array<i64: 2, 1, 32, 64>}]} {
    %c0 = arith.constant 0 : index
    %c0_0 = arith.constant 0 : index
    %c0_1 = arith.constant 0 : index
    %0 = vector.load %arg2[%c0, %c0_0, %c0_1] : memref<1x128x16xbf16, #tpu.memory_space<vmem>>, vector<1x128x16xbf16>
    %1 = vector.shape_cast %0 : vector<1x128x16xbf16> to vector<128x16xbf16>
    %c128_i32 = arith.constant 128 : i32
    %2 = arith.muli %arg1, %c128_i32 : i32
    %c0_i32 = arith.constant 0 : i32
    %3 = arith.addi %2, %c0_i32 : i32
    %4 = tpu.assume_multiple %3, 8 : i32
    %c0_2 = arith.constant 0 : index
    %5 = arith.index_cast %4 : i32 to index
    %c0_3 = arith.constant 0 : index
    %6 = vector.load %arg2[%c0_2, %5, %c0_3] : memref<1x128x16xbf16, #tpu.memory_space<vmem>>, vector<1x64x16xbf16>
    %7 = vector.shape_cast %6 : vector<1x64x16xbf16> to vector<64x16xbf16>
    %cst = arith.constant dense<0.000000e+00> : vector<128x64xf32>
    %8 = tpu.matmul %1, %7, %cst {dimension_numbers = #tpu.dot_dimension_numbers<[1], [1], [0], [0], [0, 0, 1, 0], [], []>} : vector<128x16xbf16>, vector<64x16xbf16>, vector<128x64xf32> -> vector<128x64xf32>
    %cst_4 = arith.constant 3.000000e+01 : f32
    %9 = vector.broadcast %cst_4 : f32 to vector<128x64xf32>
    %10 = arith.mulf %8, %9 : vector<128x64xf32>
    %cst_5 = arith.constant dense<0xFF800000> : vector<64xf32>
    %11 = vector.multi_reduction <maximumf>, %10, %cst_5 [0] : vector<128x64xf32> to vector<64xf32>
    %12 = vector.shape_cast %11 : vector<64xf32> to vector<1x64xf32>
    %13 = vector.broadcast %12 : vector<1x64xf32> to vector<128x64xf32>
    %14 = arith.subf %10, %13 : vector<128x64xf32>
    %15 = math.exp %14 : vector<128x64xf32>
    %cst_6 = arith.constant dense<0.000000e+00> : vector<64xf32>
    %16 = vector.multi_reduction <add>, %15, %cst_6 [0] : vector<128x64xf32> to vector<64xf32>
    %17 = vector.shape_cast %16 : vector<64xf32> to vector<1x64xf32>
    %18 = arith.truncf %15 : vector<128x64xf32> to vector<128x64xbf16>
    %c0_7 = arith.constant 0 : index
    %c0_8 = arith.constant 0 : index
    %c0_9 = arith.constant 0 : index
    %c0_10 = arith.constant 0 : index
    %19 = vector.load %arg3[%c0_7, %c0_8, %c0_9, %c0_10] : memref<2x1x32x64xbf16, #tpu.memory_space<vmem>>, vector<1x1x32x64xbf16>
    %20 = vector.shape_cast %19 : vector<1x1x32x64xbf16> to vector<32x64xbf16>
    %21 = vector.extract_strided_slice %18 {offsets = [0, 0], sizes = [64, 64], strides = [1, 1]} : vector<128x64xbf16> to vector<64x64xbf16>
    %cst_11 = arith.constant dense<0.000000e+00> : vector<32x64xf32>
    %22 = tpu.matmul %20, %21, %cst_11 {dimension_numbers = #tpu.dot_dimension_numbers<[1], [0], [0], [1], [0, 0, 1, 1], [], []>} : vector<32x64xbf16>, vector<64x64xbf16>, vector<32x64xf32> -> vector<32x64xf32>
    %c1 = arith.constant 1 : index
    %c0_12 = arith.constant 0 : index
    %c0_13 = arith.constant 0 : index
    %c0_14 = arith.constant 0 : index
    %23 = vector.load %arg3[%c1, %c0_12, %c0_13, %c0_14] : memref<2x1x32x64xbf16, #tpu.memory_space<vmem>>, vector<1x1x32x64xbf16>
    %24 = vector.shape_cast %23 : vector<1x1x32x64xbf16> to vector<32x64xbf16>
    %25 = vector.extract_strided_slice %18 {offsets = [64, 0], sizes = [64, 64], strides = [1, 1]} : vector<128x64xbf16> to vector<64x64xbf16>
    %cst_15 = arith.constant dense<0.000000e+00> : vector<32x64xf32>
    %26 = tpu.matmul %24, %25, %cst_15 {dimension_numbers = #tpu.dot_dimension_numbers<[1], [0], [0], [1], [0, 0, 1, 1], [], []>} : vector<32x64xbf16>, vector<64x64xbf16>, vector<32x64xf32> -> vector<32x64xf32>
    %27 = arith.addf %22, %26 : vector<32x64xf32>
    %28 = tpu.reciprocal %17 : vector<1x64xf32> -> vector<1x64xf32>
    %29 = vector.broadcast %28 : vector<1x64xf32> to vector<32x64xf32>
    %30 = arith.mulf %27, %29 : vector<32x64xf32>
    %c0_16 = arith.constant 0 : index
    %c0_17 = arith.constant 0 : index
    %c0_18 = arith.constant 0 : index
    %c0_19 = arith.constant 0 : index
    %31 = vector.load %arg4[%c0_16, %c0_17, %c0_18, %c0_19] : memref<2x1x32x64xbf16, #tpu.memory_space<vmem>>, vector<1x1x32x64xbf16>
    %32 = vector.shape_cast %31 : vector<1x1x32x64xbf16> to vector<32x64xbf16>
    %33 = arith.extf %32 : vector<32x64xbf16> to vector<32x64xf32>
    %34 = arith.addf %33, %30 : vector<32x64xf32>
    %cst_20 = arith.constant dense<0.000000e+00> : vector<32xf32>
    %35 = vector.multi_reduction <add>, %34, %cst_20 [1] : vector<32x64xf32> to vector<32xf32>
    %36 = vector.shape_cast %35 : vector<32xf32> to vector<32x1xf32>
    %cst_21 = arith.constant 6.400000e+01 : f32
    %37 = vector.broadcast %cst_21 : f32 to vector<32x1xf32>
    %38 = arith.divf %36, %37 : vector<32x1xf32>
    %39 = vector.broadcast %38 : vector<32x1xf32> to vector<32x64xf32>
    %40 = arith.subf %34, %39 : vector<32x64xf32>
    %41 = arith.mulf %40, %40 : vector<32x64xf32>
    %cst_22 = arith.constant dense<0.000000e+00> : vector<32xf32>
    %42 = vector.multi_reduction <add>, %41, %cst_22 [1] : vector<32x64xf32> to vector<32xf32>
    %43 = vector.shape_cast %42 : vector<32xf32> to vector<32x1xf32>
    %cst_23 = arith.constant 6.400000e+01 : f32
    %44 = vector.broadcast %cst_23 : f32 to vector<32x1xf32>
    %45 = arith.divf %43, %44 : vector<32x1xf32>
    %cst_24 = arith.constant 9.99999974E-6 : f32
    %46 = vector.broadcast %cst_24 : f32 to vector<32x1xf32>
    %47 = arith.addf %45, %46 : vector<32x1xf32>
    %48 = math.rsqrt %47 : vector<32x1xf32>
    %49 = vector.broadcast %48 : vector<32x1xf32> to vector<32x64xf32>
    %50 = arith.mulf %40, %49 : vector<32x64xf32>
    %51 = arith.truncf %50 : vector<32x64xf32> to vector<32x64xbf16>
    %c0_25 = arith.constant 0 : index
    %c0_26 = arith.constant 0 : index
    %c0_27 = arith.constant 0 : index
    %c0_28 = arith.constant 0 : index
    %52 = vector.load %arg5[%c0_25, %c0_26, %c0_27, %c0_28] : memref<2x1x32x64xbf16, #tpu.memory_space<vmem>>, vector<1x1x32x64xbf16>
    %53 = vector.shape_cast %52 : vector<1x1x32x64xbf16> to vector<32x64xbf16>
    %54 = vector.shape_cast %51 : vector<32x64xbf16> to vector<1x1x32x64xbf16>
    tpu.vector_store %arg5[%c0_25, %c0_26, %c0_27, %c0_28], %54 {strides = array<i32>} : memref<2x1x32x64xbf16, #tpu.memory_space<vmem>>, vector<1x1x32x64xbf16>,
    %c128_i32_29 = arith.constant 128 : i32
    %55 = arith.muli %arg1, %c128_i32_29 : i32
    %c64_i32 = arith.constant 64 : i32
    %56 = arith.addi %55, %c64_i32 : i32
    %57 = tpu.assume_multiple %56, 8 : i32
    %c0_30 = arith.constant 0 : index
    %58 = arith.index_cast %57 : i32 to index
    %c0_31 = arith.constant 0 : index
    %59 = vector.load %arg2[%c0_30, %58, %c0_31] : memref<1x128x16xbf16, #tpu.memory_space<vmem>>, vector<1x64x16xbf16>
    %60 = vector.shape_cast %59 : vector<1x64x16xbf16> to vector<64x16xbf16>
    %cst_32 = arith.constant dense<0.000000e+00> : vector<128x64xf32>
    %61 = tpu.matmul %1, %60, %cst_32 {dimension_numbers = #tpu.dot_dimension_numbers<[1], [1], [0], [0], [0, 0, 1, 0], [], []>} : vector<128x16xbf16>, vector<64x16xbf16>, vector<128x64xf32> -> vector<128x64xf32>
    %cst_33 = arith.constant 3.000000e+01 : f32
    %62 = vector.broadcast %cst_33 : f32 to vector<128x64xf32>
    %63 = arith.mulf %61, %62 : vector<128x64xf32>
    %cst_34 = arith.constant dense<0xFF800000> : vector<64xf32>
    %64 = vector.multi_reduction <maximumf>, %63, %cst_34 [0] : vector<128x64xf32> to vector<64xf32>
    %65 = vector.shape_cast %64 : vector<64xf32> to vector<1x64xf32>
    %66 = vector.broadcast %65 : vector<1x64xf32> to vector<128x64xf32>
    %67 = arith.subf %63, %66 : vector<128x64xf32>
    %68 = math.exp %67 : vector<128x64xf32>
    %cst_35 = arith.constant dense<0.000000e+00> : vector<64xf32>
    %69 = vector.multi_reduction <add>, %68, %cst_35 [0] : vector<128x64xf32> to vector<64xf32>
    %70 = vector.shape_cast %69 : vector<64xf32> to vector<1x64xf32>
    %71 = arith.truncf %68 : vector<128x64xf32> to vector<128x64xbf16>
    %c0_36 = arith.constant 0 : index
    %c0_37 = arith.constant 0 : index
    %c0_38 = arith.constant 0 : index
    %c0_39 = arith.constant 0 : index
    %72 = vector.load %arg3[%c0_36, %c0_37, %c0_38, %c0_39] : memref<2x1x32x64xbf16, #tpu.memory_space<vmem>>, vector<1x1x32x64xbf16>
    %73 = vector.shape_cast %72 : vector<1x1x32x64xbf16> to vector<32x64xbf16>
    %74 = vector.extract_strided_slice %71 {offsets = [0, 0], sizes = [64, 64], strides = [1, 1]} : vector<128x64xbf16> to vector<64x64xbf16>
    %cst_40 = arith.constant dense<0.000000e+00> : vector<32x64xf32>
    %75 = tpu.matmul %73, %74, %cst_40 {dimension_numbers = #tpu.dot_dimension_numbers<[1], [0], [0], [1], [0, 0, 1, 1], [], []>} : vector<32x64xbf16>, vector<64x64xbf16>, vector<32x64xf32> -> vector<32x64xf32>
    %c1_41 = arith.constant 1 : index
    %c0_42 = arith.constant 0 : index
    %c0_43 = arith.constant 0 : index
    %c0_44 = arith.constant 0 : index
    %76 = vector.load %arg3[%c1_41, %c0_42, %c0_43, %c0_44] : memref<2x1x32x64xbf16, #tpu.memory_space<vmem>>, vector<1x1x32x64xbf16>
    %77 = vector.shape_cast %76 : vector<1x1x32x64xbf16> to vector<32x64xbf16>
    %78 = vector.extract_strided_slice %71 {offsets = [64, 0], sizes = [64, 64], strides = [1, 1]} : vector<128x64xbf16> to vector<64x64xbf16>
    %cst_45 = arith.constant dense<0.000000e+00> : vector<32x64xf32>
    %79 = tpu.matmul %77, %78, %cst_45 {dimension_numbers = #tpu.dot_dimension_numbers<[1], [0], [0], [1], [0, 0, 1, 1], [], []>} : vector<32x64xbf16>, vector<64x64xbf16>, vector<32x64xf32> -> vector<32x64xf32>
    %80 = arith.addf %75, %79 : vector<32x64xf32>
    %81 = tpu.reciprocal %70 : vector<1x64xf32> -> vector<1x64xf32>
    %82 = vector.broadcast %81 : vector<1x64xf32> to vector<32x64xf32>
    %83 = arith.mulf %80, %82 : vector<32x64xf32>
    %c1_46 = arith.constant 1 : index
    %c0_47 = arith.constant 0 : index
    %c0_48 = arith.constant 0 : index
    %c0_49 = arith.constant 0 : index
    %84 = vector.load %arg4[%c1_46, %c0_47, %c0_48, %c0_49] : memref<2x1x32x64xbf16, #tpu.memory_space<vmem>>, vector<1x1x32x64xbf16>
    %85 = vector.shape_cast %84 : vector<1x1x32x64xbf16> to vector<32x64xbf16>
    %86 = arith.extf %85 : vector<32x64xbf16> to vector<32x64xf32>
    %87 = arith.addf %86, %83 : vector<32x64xf32>
    %cst_50 = arith.constant dense<0.000000e+00> : vector<32xf32>
    %88 = vector.multi_reduction <add>, %87, %cst_50 [1] : vector<32x64xf32> to vector<32xf32>
    %89 = vector.shape_cast %88 : vector<32xf32> to vector<32x1xf32>
    %cst_51 = arith.constant 6.400000e+01 : f32
    %90 = vector.broadcast %cst_51 : f32 to vector<32x1xf32>
    %91 = arith.divf %89, %90 : vector<32x1xf32>
    %92 = vector.broadcast %91 : vector<32x1xf32> to vector<32x64xf32>
    %93 = arith.subf %87, %92 : vector<32x64xf32>
    %94 = arith.mulf %93, %93 : vector<32x64xf32>
    %cst_52 = arith.constant dense<0.000000e+00> : vector<32xf32>
    %95 = vector.multi_reduction <add>, %94, %cst_52 [1] : vector<32x64xf32> to vector<32xf32>
    %96 = vector.shape_cast %95 : vector<32xf32> to vector<32x1xf32>
    %cst_53 = arith.constant 6.400000e+01 : f32
    %97 = vector.broadcast %cst_53 : f32 to vector<32x1xf32>
    %98 = arith.divf %96, %97 : vector<32x1xf32>
    %cst_54 = arith.constant 9.99999974E-6 : f32
    %99 = vector.broadcast %cst_54 : f32 to vector<32x1xf32>
    %100 = arith.addf %98, %99 : vector<32x1xf32>
    %101 = math.rsqrt %100 : vector<32x1xf32>
    %102 = vector.broadcast %101 : vector<32x1xf32> to vector<32x64xf32>
    %103 = arith.mulf %93, %102 : vector<32x64xf32>
    %104 = arith.truncf %103 : vector<32x64xf32> to vector<32x64xbf16>
    %c1_55 = arith.constant 1 : index
    %c0_56 = arith.constant 0 : index
    %c0_57 = arith.constant 0 : index
    %c0_58 = arith.constant 0 : index
    %105 = vector.load %arg5[%c1_55, %c0_56, %c0_57, %c0_58] : memref<2x1x32x64xbf16, #tpu.memory_space<vmem>>, vector<1x1x32x64xbf16>
    %106 = vector.shape_cast %105 : vector<1x1x32x64xbf16> to vector<32x64xbf16>
    %107 = vector.shape_cast %104 : vector<32x64xbf16> to vector<1x1x32x64xbf16>
    tpu.vector_store %arg5[%c1_55, %c0_56, %c0_57, %c0_58], %107 {strides = array<i32>} : memref<2x1x32x64xbf16, #tpu.memory_space<vmem>>, vector<1x1x32x64xbf16>,
    return
  }
  func.func @transform_0(%arg0: i32, %arg1: i32) -> (i32, i32, i32) {
    %c0_i32 = arith.constant 0 : i32
    %c0_i32_0 = arith.constant 0 : i32
    %c0_i32_1 = arith.constant 0 : i32
    return %arg0, %c0_i32, %c0_i32_0 : i32, i32, i32
  }
  func.func @transform_1(%arg0: i32, %arg1: i32) -> (i32, i32, i32, i32) {
    %c0_i32 = arith.constant 0 : i32
    %c0_i32_0 = arith.constant 0 : i32
    %c0_i32_1 = arith.constant 0 : i32
    %c0_i32_2 = arith.constant 0 : i32
    return %c0_i32, %arg0, %c0_i32_0, %c0_i32_1 : i32, i32, i32, i32
  }
  func.func @transform_2(%arg0: i32, %arg1: i32) -> (i32, i32, i32, i32) {
    %c0_i32 = arith.constant 0 : i32
    %c0_i32_0 = arith.constant 0 : i32
    %c0_i32_1 = arith.constant 0 : i32
    return %arg1, %arg0, %c0_i32, %c0_i32_0 : i32, i32, i32, i32
  }
  func.func @transform_3(%arg0: i32, %arg1: i32) -> (i32, i32, i32, i32) {
    %c0_i32 = arith.constant 0 : i32
    %c0_i32_0 = arith.constant 0 : i32
    %c0_i32_1 = arith.constant 0 : i32
    return %arg1, %arg0, %c0_i32, %c0_i32_0 : i32, i32, i32, i32
  }
}

</mosaic_0001>

<llo_original>
// kernel: tpu_custom_call.1
$region0: #{tpu_custom_call.1}
  #allocation0 [shape = 'u32[]', space=smem, size = 0x4, offset = 0x4, fixed_abs, tag = 'smem constant byte address 0x4 - core index']
  #allocation1 [shape = 'u32[144,128]{1,0:T(1,128)}', space=vmem, size = 0x12000, scoped, tag = 'internal scratch']
  #allocation6 [shape = 's32[]', space=sflag, size = 0x4, offset = 0, fixed_abs, tag = 'sflag constant byte address 0x0 - dummy sync flag']
  %s0 = inlined_call_operand.vmem [shape: bf16[2,128,16], index: 0, kind: input, shape index: {}]
  %s1 = inlined_call_operand.vmem [shape: bf16[2,2,32,64], index: 1, kind: input, shape index: {}]
  %s2 = inlined_call_operand.vmem [shape: bf16[2,2,32,64], index: 2, kind: input, shape index: {}]
  %s3 = inlined_call_operand.hbm [shape: bf16[2,2,32,64], index: 3, kind: output, shape index: {}]
  %s4 = sld [smem:[#allocation0]]
  $region127: #{tpu_custom_call.1} parent=0
    _
  %s6 = ssub.s32 1, %s4
  %s7 = scalar_select 0, %s6, %s4
  $region1: #{tpu_custom_call.1} parent=0
    #allocation2 [shape = 'u8[32768]{0}', space=vmem, size = 0x8000, scoped, tag = 'input window, operand 1']
    #allocation3 [shape = 'u8[32768]{0}', space=vmem, size = 0x8000, scoped, tag = 'input window, operand 2']
    #allocation4 [shape = 'u8[32768]{0}', space=vmem, size = 0x8000, scoped, tag = 'output window, operand 0']
    #allocation5 [shape = 's32[2]{0}', space=sflag, size = 0x8, scoped, tag = 'scoped memory for tpu_custom_call.1']
    %8 = vsyncpa [#allocation5], 0
    %s9 = scalar_lea.sflag [#allocation5], 1
    %10 = vsyncpa %s9, 0
    loop: start=0, step=1, limit=4
    $region2: #{tpu_custom_call.1} parent=1 // loop_pre_header
      _
    $region3: #{tpu_custom_call.1} parent=1 // loop_header
      %s12 = sphi 0, %s16
      %p13 = scmp.ge.s32.totalorder %s12, 4
      %s19 = sphi 0, %s31
      %s20 = sphi 0, %s27
      %s21 = sphi 0, %s19
      %s22 = sphi 0, %s20
      %s23 = sphi 0, %s21
      %s24 = sphi 0, %s22
      %s34 = sphi 0, %s36
      %s37 = sphi 0, %s34
      %s38 = sphi 0, %s37
      %s54 = sphi 0, %s38
      %s60 = sphi 0, %s62
      %s63 = sphi 0, %s60
      %s64 = sphi 0, %s63
      %s80 = sphi 0, %s64
      %s88 = sphi 0, %s90
      %s91 = sphi 0, %s88
      %s92 = sphi 0, %s91
      %s108 = sphi 0, %s92
      %s116 = sphi 0, %s118
      %s119 = sphi 0, %s116
      %s120 = sphi 0, %s119
      %s136 = sphi 0, %s120
    $region4: #{tpu_custom_call.1} parent=1 // loop_header_branch
      %15 = sbr.rel (%p13) target = $region8
    $region5: #{tpu_custom_call.1} parent=1 // loop_body
      %s17 = ssub.s32 %s12, 1
      %s18 = ssub.s32 %s12, 2
      %s25 = sadd.s32 1, %s20
      %p26 = scmp.ge.s32.totalorder %s25, 1
      %s27 = scalar_select %p26, 0, %s25
      %s28 = sadd.s32 1, %s19
      %s29 = scalar_select %p26, %s28, %s19
      %p30 = scmp.ge.s32.totalorder %s29, 2
      %s31 = scalar_select %p30, 0, %s29
      %s32 = ssub.s32 %s19, %s31
      %p33 = scmp.eq.s32.totalorder %s32, 0
      %s35 = sadd.s32 %s34, 1
      %s36 = scalar_select %p33, %s34, %s35
      %p39 = pneg %p33
      %p40 = scmp.eq.s32.totalorder %s12, 1
      %p41 = por %p39, %p40
      %p42 = scmp.ne.s32.totalorder %s34, %s37
      %p43 = scmp.eq.s32.totalorder %s12, 0
      %p44 = por %p42, %p43
      %p45 = scmp.ne.s32.totalorder %s34, %s37
      %p46 = scmp.eq.s32.totalorder %s17, 1
      %p47 = por %p45, %p46
      %p48 = scmp.ne.s32.totalorder %s37, %s38
      %p49 = scmp.eq.s32.totalorder %s17, 0
      %p50 = por %p48, %p49
      %p51 = scmp.ne.s32.totalorder %s37, %s38
      %p52 = scmp.eq.s32.totalorder %s18, 1
      %p53 = por %p51, %p52
      %p55 = scmp.ne.s32.totalorder %s38, %s54
      %p56 = scmp.eq.s32.totalorder %s18, 0
      %p57 = por %p55, %p56
      %s58 = ssub.s32 %s19, %s31
      %p59 = scmp.eq.s32.totalorder %s58, 0
      %s61 = sadd.s32 %s60, 1
      %s62 = scalar_select %p59, %s60, %s61
      %p65 = pneg %p59
      %p66 = scmp.eq.s32.totalorder %s12, 1
      %p67 = por %p65, %p66
      %p68 = scmp.ne.s32.totalorder %s60, %s63
      %p69 = scmp.eq.s32.totalorder %s12, 0
      %p70 = por %p68, %p69
      %p71 = scmp.ne.s32.totalorder %s60, %s63
      %p72 = scmp.eq.s32.totalorder %s17, 1
      %p73 = por %p71, %p72
      %p74 = scmp.ne.s32.totalorder %s63, %s64
      %p75 = scmp.eq.s32.totalorder %s17, 0
      %p76 = por %p74, %p75
      %p77 = scmp.ne.s32.totalorder %s63, %s64
      %p78 = scmp.eq.s32.totalorder %s18, 1
      %p79 = por %p77, %p78
      %p81 = scmp.ne.s32.totalorder %s64, %s80
      %p82 = scmp.eq.s32.totalorder %s18, 0
      %p83 = por %p81, %p82
      %s84 = ssub.s32 %s20, %s27
      %s85 = ssub.s32 %s19, %s31
      %s86 = sor.u32 %s84, %s85
      %p87 = scmp.eq.s32.totalorder %s86, 0
      %s89 = sadd.s32 %s88, 1
      %s90 = scalar_select %p87, %s88, %s89
      %p93 = pneg %p87
      %p94 = scmp.eq.s32.totalorder %s12, 1
      %p95 = por %p93, %p94
      %p96 = scmp.ne.s32.totalorder %s88, %s91
      %p97 = scmp.eq.s32.totalorder %s12, 0
      %p98 = por %p96, %p97
      %p99 = scmp.ne.s32.totalorder %s88, %s91
      %p100 = scmp.eq.s32.totalorder %s17, 1
      %p101 = por %p99, %p100
      %p102 = scmp.ne.s32.totalorder %s91, %s92
      %p103 = scmp.eq.s32.totalorder %s17, 0
      %p104 = por %p102, %p103
      %p105 = scmp.ne.s32.totalorder %s91, %s92
      %p106 = scmp.eq.s32.totalorder %s18, 1
      %p107 = por %p105, %p106
      %p109 = scmp.ne.s32.totalorder %s92, %s108
      %p110 = scmp.eq.s32.totalorder %s18, 0
      %p111 = por %p109, %p110
      %s112 = ssub.s32 %s20, %s27
      %s113 = ssub.s32 %s19, %s31
      %s114 = sor.u32 %s112, %s113
      %p115 = scmp.eq.s32.totalorder %s114, 0
      %s117 = sadd.s32 %s116, 1
      %s118 = scalar_select %p115, %s116, %s117
      %p121 = pneg %p115
      %p122 = scmp.eq.s32.totalorder %s12, 1
      %p123 = por %p121, %p122
      %p124 = scmp.ne.s32.totalorder %s116, %s119
      %p125 = scmp.eq.s32.totalorder %s12, 0
      %p126 = por %p124, %p125
      %p127 = scmp.ne.s32.totalorder %s116, %s119
      %p128 = scmp.eq.s32.totalorder %s17, 1
      %p129 = por %p127, %p128
      %p130 = scmp.ne.s32.totalorder %s119, %s120
      %p131 = scmp.eq.s32.totalorder %s17, 0
      %p132 = por %p130, %p131
      %p133 = scmp.ne.s32.totalorder %s119, %s120
      %p134 = scmp.eq.s32.totalorder %s18, 1
      %p135 = por %p133, %p134
      %p137 = scmp.ne.s32.totalorder %s120, %s136
      %p138 = scmp.eq.s32.totalorder %s18, 0
      %p139 = por %p137, %p138
      %p140 = scmp.le.s32.totalorder 1, %s12
      %p141 = scmp.lt.s32.totalorder %s12, 3
      %p142 = pnand %p140, %p141
      %p143 = pneg %p142
      // Predicated region
      $region9: #{tpu_custom_call.1} parent=5 // pred_check
        _
      $region10: #{tpu_custom_call.1} parent=5 // pred_check_branch
        %145 = sbr.rel (%p142) target = $region12
      $region11: #{tpu_custom_call.1} parent=5 // pred_region
        %s146 = ssub.s32 %s12, 1
      $region12: #{tpu_custom_call.1} parent=5 // pred_fallthru
        _
      %p147 = scmp.lt.s32.totalorder %s12, 2
      // Predicated region
      $region13: #{tpu_custom_call.1} parent=5 // pred_check
        %p148 = pneg %p147
      $region14: #{tpu_custom_call.1} parent=5 // pred_check_branch
        %150 = sbr.rel (%p148) target = $region16
      $region15: #{tpu_custom_call.1} parent=5 // pred_region
        // Predicated region
        $region17: #{tpu_custom_call.1} parent=15 // pred_check
          %p151 = pneg %p44
        $region18: #{tpu_custom_call.1} parent=15 // pred_check_branch
          %153 = sbr.rel (%p151) target = $region20
        $region19: #{tpu_custom_call.1} parent=15 // pred_region
          %p154 = scmp.lt.s32.totalorder %s19, 1
          %s155 = scalar_select %p154, %s19, 1
          %s156 = smul.addr %s155, 16
          %s157 = smul.addr %s156, 4
          %s158 = scalar_lea.vmem %s0, %s157
        $region20: #{tpu_custom_call.1} parent=15 // pred_fallthru
          _
        // Predicated region
        $region21: #{tpu_custom_call.1} parent=15 // pred_check
          %p159 = pneg %p70
        $region22: #{tpu_custom_call.1} parent=15 // pred_check_branch
          %161 = sbr.rel (%p159) target = $region24
        $region23: #{tpu_custom_call.1} parent=15 // pred_region
          %s162 = sand.u32 %s60, 1
          %s163 = sand.u32 %s60, 1
          %s164 = smul.addr %s163, 32
          %s165 = scalar_lea.vmem [#allocation2], %s164
          %s166 = smul.addr %s19, 4
          %s167 = smul.addr %s166, 4
          %s168 = scalar_lea.vmem %s1, %s167
          // Predicated region
          $region25: #{tpu_custom_call.1} parent=23 // pred_check
            _
          $region26: #{tpu_custom_call.1} parent=23 // pred_check_branch
            %170 = sbr.rel (0) target = $region28
          $region27: #{tpu_custom_call.1} parent=23 // pred_region
            // Predicated region
            $region29: #{tpu_custom_call.1} parent=27 // pred_check
              _
            $region30: #{tpu_custom_call.1} parent=27 // pred_check_branch
              %172 = sbr.rel target = $region32
            $region31: #{tpu_custom_call.1} parent=27 // pred_region
              // Predicated region
              $region44: #{tpu_custom_call.1} parent=31 // pred_check
                _
              $region45: #{tpu_custom_call.1} parent=31 // pred_check_branch
                %201 = sbr.rel (0) target = $region47
              $region46: #{tpu_custom_call.1} parent=31 // pred_region
                loop: start=0, step=1, limit=1
                $region48: #{tpu_custom_call.1} parent=46 // loop_pre_header
                  _
                $region49: #{tpu_custom_call.1} parent=46 // loop_header
                  %s203 = sphi 0, %s207
                  %p204 = scmp.ge.s32.totalorder %s203, 1
                  %s208 = sphi %s168, %s168
                  %s209 = sphi %s165, %s165
                $region50: #{tpu_custom_call.1} parent=46 // loop_header_branch
                  %206 = sbr.rel (%p204) target = $region54
                $region51: #{tpu_custom_call.1} parent=46 // loop_body
                  _
                $region52: #{tpu_custom_call.1} parent=46 // loop_footer
                  %s207 = sadd.s32 1, %s203
                $region53: #{tpu_custom_call.1} parent=46 // loop_footer_branch
                  %202 = sbr.rel target = $region49
                $region54: #{tpu_custom_call.1} parent=46 // loop_exit
                  _
                loop: start=0, step=1, limit=1
                $region55: #{tpu_custom_call.1} parent=46 // loop_pre_header
                  _
                $region56: #{tpu_custom_call.1} parent=46 // loop_header
                  %s212 = sphi 0, %s216
                  %p213 = scmp.ge.s32.totalorder %s212, 1
                  %s217 = sphi %s168, %s168
                  %s218 = sphi %s165, %s165
                $region57: #{tpu_custom_call.1} parent=46 // loop_header_branch
                  %215 = sbr.rel (%p213) target = $region61
                $region58: #{tpu_custom_call.1} parent=46 // loop_body
                  %v219 = vld [vmem:[%s217] sm:$0xf]
                  %220 = vst [vmem:[%s218] sm:$0xf] %v219
                  %v221 = vld [vmem:[%s217 + $0x4] sm:$0xf]
                  %222 = vst [vmem:[%s218 + $0x4] sm:$0xf] %v221
                  %v223 = vld [vmem:[%s217 + $0x8] sm:$0xf]
                  %224 = vst [vmem:[%s218 + $0x8] sm:$0xf] %v223
                  %v225 = vld [vmem:[%s217 + $0xc] sm:$0xf]
                  %226 = vst [vmem:[%s218 + $0xc] sm:$0xf] %v225
                  %v227 = vld [vmem:[%s217 + $0x20] sm:$0xf]
                  %228 = vst [vmem:[%s218 + $0x10] sm:$0xf] %v227
                  %v229 = vld [vmem:[%s217 + $0x24] sm:$0xf]
                  %230 = vst [vmem:[%s218 + $0x14] sm:$0xf] %v229
                  %v231 = vld [vmem:[%s217 + $0x28] sm:$0xf]
                  %232 = vst [vmem:[%s218 + $0x18] sm:$0xf] %v231
                  %v233 = vld [vmem:[%s217 + $0x2c] sm:$0xf]
                  %234 = vst [vmem:[%s218 + $0x1c] sm:$0xf] %v233
                $region59: #{tpu_custom_call.1} parent=46 // loop_footer
                  %s216 = sadd.s32 1, %s212
                $region60: #{tpu_custom_call.1} parent=46 // loop_footer_branch
                  %211 = sbr.rel target = $region56
                $region61: #{tpu_custom_call.1} parent=46 // loop_exit
                  _
              $region47: #{tpu_custom_call.1} parent=31 // pred_fallthru
                _
            $region32: #{tpu_custom_call.1} parent=27 // pred_fallthru
              _
            // Predicated region
            $region33: #{tpu_custom_call.1} parent=27 // pred_check
              _
            $region34: #{tpu_custom_call.1} parent=27 // pred_check_branch
              %174 = sbr.rel (0) target = $region36
            $region35: #{tpu_custom_call.1} parent=27 // pred_region
              loop: start=0, step=1, limit=1
              $region37: #{tpu_custom_call.1} parent=35 // loop_pre_header
                _
              $region38: #{tpu_custom_call.1} parent=35 // loop_header
                %s177 = sphi 0, %s181
                %p178 = scmp.ge.s32.totalorder %s177, 1
                %s182 = sphi %s168, %s168
                %s183 = sphi %s165, %s165
              $region39: #{tpu_custom_call.1} parent=35 // loop_header_branch
                %180 = sbr.rel (%p178) target = $region43
              $region40: #{tpu_custom_call.1} parent=35 // loop_body
                %v184 = vld [vmem:[%s182] sm:$0xf]
                %185 = vst [vmem:[%s183] sm:$0xf] %v184
                %v186 = vld [vmem:[%s182 + $0x4] sm:$0xf]
                %187 = vst [vmem:[%s183 + $0x4] sm:$0xf] %v186
                %v188 = vld [vmem:[%s182 + $0x8] sm:$0xf]
                %189 = vst [vmem:[%s183 + $0x8] sm:$0xf] %v188
                %v190 = vld [vmem:[%s182 + $0xc] sm:$0xf]
                %191 = vst [vmem:[%s183 + $0xc] sm:$0xf] %v190
                %v192 = vld [vmem:[%s182 + $0x20] sm:$0xf]
                %193 = vst [vmem:[%s183 + $0x10] sm:$0xf] %v192
                %v194 = vld [vmem:[%s182 + $0x24] sm:$0xf]
                %195 = vst [vmem:[%s183 + $0x14] sm:$0xf] %v194
                %v196 = vld [vmem:[%s182 + $0x28] sm:$0xf]
                %197 = vst [vmem:[%s183 + $0x18] sm:$0xf] %v196
                %v198 = vld [vmem:[%s182 + $0x2c] sm:$0xf]
                %199 = vst [vmem:[%s183 + $0x1c] sm:$0xf] %v198
              $region41: #{tpu_custom_call.1} parent=35 // loop_footer
                %s181 = sadd.s32 1, %s177
              $region42: #{tpu_custom_call.1} parent=35 // loop_footer_branch
                %176 = sbr.rel target = $region38
              $region43: #{tpu_custom_call.1} parent=35 // loop_exit
                _
            $region36: #{tpu_custom_call.1} parent=27 // pred_fallthru
              _
          $region28: #{tpu_custom_call.1} parent=23 // pred_fallthru
            _
          %235 = vnop
        $region24: #{tpu_custom_call.1} parent=15 // pred_fallthru
          _
        // Predicated region
        $region62: #{tpu_custom_call.1} parent=15 // pred_check
          %p236 = pneg %p98
        $region63: #{tpu_custom_call.1} parent=15 // pred_check_branch
          %238 = sbr.rel (%p236) target = $region65
        $region64: #{tpu_custom_call.1} parent=15 // pred_region
          %s239 = sand.u32 %s88, 1
          %s240 = sand.u32 %s88, 1
          %s241 = smul.addr %s240, 32
          %s242 = scalar_lea.vmem [#allocation3], %s241
          %s243 = smul.u32 2, %s20
          %s244 = smul.addr %s19, 4
          %s245 = smul.addr %s243, 8
          %s246 = sadd.s32 %s244, %s245
          %s247 = smul.addr %s246, 4
          %s248 = scalar_lea.vmem %s2, %s247
          // Predicated region
          $region66: #{tpu_custom_call.1} parent=64 // pred_check
            _
          $region67: #{tpu_custom_call.1} parent=64 // pred_check_branch
            %250 = sbr.rel (0) target = $region69
          $region68: #{tpu_custom_call.1} parent=64 // pred_region
            // Predicated region
            $region70: #{tpu_custom_call.1} parent=68 // pred_check
              _
            $region71: #{tpu_custom_call.1} parent=68 // pred_check_branch
              %252 = sbr.rel target = $region73
            $region72: #{tpu_custom_call.1} parent=68 // pred_region
              // Predicated region
              $region85: #{tpu_custom_call.1} parent=72 // pred_check
                _
              $region86: #{tpu_custom_call.1} parent=72 // pred_check_branch
                %281 = sbr.rel (0) target = $region88
              $region87: #{tpu_custom_call.1} parent=72 // pred_region
                loop: start=0, step=1, limit=1
                $region89: #{tpu_custom_call.1} parent=87 // loop_pre_header
                  _
                $region90: #{tpu_custom_call.1} parent=87 // loop_header
                  %s283 = sphi 0, %s287
                  %p284 = scmp.ge.s32.totalorder %s283, 1
                  %s288 = sphi %s248, %s248
                  %s289 = sphi %s242, %s242
                $region91: #{tpu_custom_call.1} parent=87 // loop_header_branch
                  %286 = sbr.rel (%p284) target = $region95
                $region92: #{tpu_custom_call.1} parent=87 // loop_body
                  _
                $region93: #{tpu_custom_call.1} parent=87 // loop_footer
                  %s287 = sadd.s32 1, %s283
                $region94: #{tpu_custom_call.1} parent=87 // loop_footer_branch
                  %282 = sbr.rel target = $region90
                $region95: #{tpu_custom_call.1} parent=87 // loop_exit
                  _
                loop: start=0, step=1, limit=1
                $region96: #{tpu_custom_call.1} parent=87 // loop_pre_header
                  _
                $region97: #{tpu_custom_call.1} parent=87 // loop_header
                  %s292 = sphi 0, %s296
                  %p293 = scmp.ge.s32.totalorder %s292, 1
                  %s297 = sphi %s248, %s248
                  %s298 = sphi %s242, %s242
                $region98: #{tpu_custom_call.1} parent=87 // loop_header_branch
                  %295 = sbr.rel (%p293) target = $region102
                $region99: #{tpu_custom_call.1} parent=87 // loop_body
                  %v299 = vld [vmem:[%s297] sm:$0xf]
                  %300 = vst [vmem:[%s298] sm:$0xf] %v299
                  %v301 = vld [vmem:[%s297 + $0x4] sm:$0xf]
                  %302 = vst [vmem:[%s298 + $0x4] sm:$0xf] %v301
                  %v303 = vld [vmem:[%s297 + $0x8] sm:$0xf]
                  %304 = vst [vmem:[%s298 + $0x8] sm:$0xf] %v303
                  %v305 = vld [vmem:[%s297 + $0xc] sm:$0xf]
                  %306 = vst [vmem:[%s298 + $0xc] sm:$0xf] %v305
                  %v307 = vld [vmem:[%s297 + $0x20] sm:$0xf]
                  %308 = vst [vmem:[%s298 + $0x10] sm:$0xf] %v307
                  %v309 = vld [vmem:[%s297 + $0x24] sm:$0xf]
                  %310 = vst [vmem:[%s298 + $0x14] sm:$0xf] %v309
                  %v311 = vld [vmem:[%s297 + $0x28] sm:$0xf]
                  %312 = vst [vmem:[%s298 + $0x18] sm:$0xf] %v311
                  %v313 = vld [vmem:[%s297 + $0x2c] sm:$0xf]
                  %314 = vst [vmem:[%s298 + $0x1c] sm:$0xf] %v313
                $region100: #{tpu_custom_call.1} parent=87 // loop_footer
                  %s296 = sadd.s32 1, %s292
                $region101: #{tpu_custom_call.1} parent=87 // loop_footer_branch
                  %291 = sbr.rel target = $region97
                $region102: #{tpu_custom_call.1} parent=87 // loop_exit
                  _
              $region88: #{tpu_custom_call.1} parent=72 // pred_fallthru
                _
            $region73: #{tpu_custom_call.1} parent=68 // pred_fallthru
              _
            // Predicated region
            $region74: #{tpu_custom_call.1} parent=68 // pred_check
              _
            $region75: #{tpu_custom_call.1} parent=68 // pred_check_branch
              %254 = sbr.rel (0) target = $region77
            $region76: #{tpu_custom_call.1} parent=68 // pred_region
              loop: start=0, step=1, limit=1
              $region78: #{tpu_custom_call.1} parent=76 // loop_pre_header
                _
              $region79: #{tpu_custom_call.1} parent=76 // loop_header
                %s257 = sphi 0, %s261
                %p258 = scmp.ge.s32.totalorder %s257, 1
                %s262 = sphi %s248, %s248
                %s263 = sphi %s242, %s242
              $region80: #{tpu_custom_call.1} parent=76 // loop_header_branch
                %260 = sbr.rel (%p258) target = $region84
              $region81: #{tpu_custom_call.1} parent=76 // loop_body
                %v264 = vld [vmem:[%s262] sm:$0xf]
                %265 = vst [vmem:[%s263] sm:$0xf] %v264
                %v266 = vld [vmem:[%s262 + $0x4] sm:$0xf]
                %267 = vst [vmem:[%s263 + $0x4] sm:$0xf] %v266
                %v268 = vld [vmem:[%s262 + $0x8] sm:$0xf]
                %269 = vst [vmem:[%s263 + $0x8] sm:$0xf] %v268
                %v270 = vld [vmem:[%s262 + $0xc] sm:$0xf]
                %271 = vst [vmem:[%s263 + $0xc] sm:$0xf] %v270
                %v272 = vld [vmem:[%s262 + $0x20] sm:$0xf]
                %273 = vst [vmem:[%s263 + $0x10] sm:$0xf] %v272
                %v274 = vld [vmem:[%s262 + $0x24] sm:$0xf]
                %275 = vst [vmem:[%s263 + $0x14] sm:$0xf] %v274
                %v276 = vld [vmem:[%s262 + $0x28] sm:$0xf]
                %277 = vst [vmem:[%s263 + $0x18] sm:$0xf] %v276
                %v278 = vld [vmem:[%s262 + $0x2c] sm:$0xf]
                %279 = vst [vmem:[%s263 + $0x1c] sm:$0xf] %v278
              $region82: #{tpu_custom_call.1} parent=76 // loop_footer
                %s261 = sadd.s32 1, %s257
              $region83: #{tpu_custom_call.1} parent=76 // loop_footer_branch
                %256 = sbr.rel target = $region79
              $region84: #{tpu_custom_call.1} parent=76 // loop_exit
                _
            $region77: #{tpu_custom_call.1} parent=68 // pred_fallthru
              _
          $region69: #{tpu_custom_call.1} parent=64 // pred_fallthru
            _
          %315 = vnop
        $region65: #{tpu_custom_call.1} parent=15 // pred_fallthru
          _
      $region16: #{tpu_custom_call.1} parent=5 // pred_fallthru
        _
      %p316 = scmp.le.s32.totalorder 1, %s12
      %p317 = scmp.lt.s32.totalorder %s12, 3
      %p318 = pnand %p316, %p317
      %p319 = pneg %p318
      // Predicated region
      $region103: #{tpu_custom_call.1} parent=5 // pred_check
        _
      $region104: #{tpu_custom_call.1} parent=5 // pred_check_branch
        %321 = sbr.rel (%p318) target = $region106
      $region105: #{tpu_custom_call.1} parent=5 // pred_region
        %s322 = ssub.s32 %s12, 1
        %s323 = sand.u32 %s63, 1
        %s324 = sand.u32 %s63, 1
        %s325 = smul.addr %s324, 32
        %s326 = scalar_lea.vmem [#allocation2], %s325
        // Predicated region
        $region107: #{tpu_custom_call.1} parent=105 // pred_check
          %p327 = pneg %p76
        $region108: #{tpu_custom_call.1} parent=105 // pred_check_branch
          %329 = sbr.rel (%p327) target = $region110
        $region109: #{tpu_custom_call.1} parent=105 // pred_region
          _
        $region110: #{tpu_custom_call.1} parent=105 // pred_fallthru
          _
        %s330 = sand.u32 %s91, 1
        %s331 = sand.u32 %s91, 1
        %s332 = smul.addr %s331, 32
        %s333 = scalar_lea.vmem [#allocation3], %s332
        // Predicated region
        $region111: #{tpu_custom_call.1} parent=105 // pred_check
          %p334 = pneg %p104
        $region112: #{tpu_custom_call.1} parent=105 // pred_check_branch
          %336 = sbr.rel (%p334) target = $region114
        $region113: #{tpu_custom_call.1} parent=105 // pred_region
          _
        $region114: #{tpu_custom_call.1} parent=105 // pred_fallthru
          _
        %p337 = scmp.lt.s32.totalorder %s21, 1
        %s338 = scalar_select %p337, %s21, 1
        %s339 = smul.addr %s338, 16
        %s340 = smul.addr %s339, 4
        %s341 = scalar_lea.vmem %s0, %s340
        %p342 = pneg %p50
        %p343 = pneg %p47
        %s344 = sand.u32 %s63, 1
        %s345 = sand.u32 %s63, 1
        %s346 = smul.addr %s345, 32
        %s347 = scalar_lea.vmem [#allocation2], %s346
        %p348 = pneg %p76
        %p349 = pneg %p73
        %s350 = sand.u32 %s91, 1
        %s351 = sand.u32 %s91, 1
        %s352 = smul.addr %s351, 32
        %s353 = scalar_lea.vmem [#allocation3], %s352
        %p354 = pneg %p104
        %p355 = pneg %p101
        %p356 = pneg %p132
        %p357 = pneg %p129
        %s358 = sand.u32 %s119, 1
        %s359 = scalar_lea.sflag [#allocation5], %s358
        %s360 = sand.u32 %s119, 1
        %s361 = smul.addr %s360, 32
        %s362 = scalar_lea.vmem [#allocation4], %s361
        %p363 = scmp.lt.s32.totalorder %s21, 1
        %s364 = scalar_select %p363, %s21, 1
        %s365 = smul.addr %s364, 16
        %s366 = smul.addr %s365, 4
        %s367 = scalar_lea.vmem %s0, %s366
        %s368 = smul.u32 2, %s22
        %s369 = smul.u32 2, %s22
        %v371 = vld [vmem:[%s367] sm:$0xf]
        %v372 = vld [vmem:[%s367 + $0x4] sm:$0xf]
        %v373 = vld [vmem:[%s367 + $0x8] sm:$0xf]
        %v374 = vld [vmem:[%s367 + $0xc] sm:$0xf]
        %v375 = vld [vmem:[%s367 + $0x10] sm:$0xf]
        %v376 = vld [vmem:[%s367 + $0x14] sm:$0xf]
        %v377 = vld [vmem:[%s367 + $0x18] sm:$0xf]
        %v378 = vld [vmem:[%s367 + $0x1c] sm:$0xf]
        %v379 = vld [vmem:[%s367 + $0x20] sm:$0xf]
        %v380 = vld [vmem:[%s367 + $0x24] sm:$0xf]
        %v381 = vld [vmem:[%s367 + $0x28] sm:$0xf]
        %v382 = vld [vmem:[%s367 + $0x2c] sm:$0xf]
        %v383 = vld [vmem:[%s367 + $0x30] sm:$0xf]
        %v384 = vld [vmem:[%s367 + $0x34] sm:$0xf]
        %v385 = vld [vmem:[%s367 + $0x38] sm:$0xf]
        %v386 = vld [vmem:[%s367 + $0x3c] sm:$0xf]
        %s387 = smul.u32 %s22, 128
        %s388 = sshra.s32 %s387, 3
        %s389 = sand.u32 %s387, 7
        %s390 = smul.addr %s388, 4
        %s391 = scalar_lea.vmem %s367, %s390
        %v392 = vld [vmem:[%s391] sm:$0xf]
        %v393 = vld [vmem:[%s391 + $0x4] sm:$0xf]
        %v394 = vld [vmem:[%s391 + $0x8] sm:$0xf]
        %v395 = vld [vmem:[%s391 + $0xc] sm:$0xf]
        %v396 = vld [vmem:[%s391 + $0x10] sm:$0xf]
        %v397 = vld [vmem:[%s391 + $0x14] sm:$0xf]
        %v398 = vld [vmem:[%s391 + $0x18] sm:$0xf]
        %v399 = vld [vmem:[%s391 + $0x1c] sm:$0xf]
        %v416 = vunpack.c.l.b16 %v371
        %v417 = vunpack.c.l.b16 %v372
        %v418 = vunpack.c.l.b16 %v373
        %v419 = vunpack.c.l.b16 %v374
        %v420 = vunpack.c.l.b16 %v375
        %v421 = vunpack.c.l.b16 %v376
        %v422 = vunpack.c.l.b16 %v377
        %v423 = vunpack.c.l.b16 %v378
        %v424 = vunpack.c.l.b16 %v379
        %v425 = vunpack.c.l.b16 %v380
        %v426 = vunpack.c.l.b16 %v381
        %v427 = vunpack.c.l.b16 %v382
        %v428 = vunpack.c.l.b16 %v383
        %v429 = vunpack.c.l.b16 %v384
        %v430 = vunpack.c.l.b16 %v385
        %v431 = vunpack.c.l.b16 %v386
        %v432 = vpack.c.b16 %v417, %v416
        %v433 = vpack.c.b16 %v419, %v418
        %v434 = vpack.c.b16 %v421, %v420
        %v435 = vpack.c.b16 %v423, %v422
        %v436 = vpack.c.b16 %v425, %v424
        %v437 = vpack.c.b16 %v427, %v426
        %v438 = vpack.c.b16 %v429, %v428
        %v439 = vpack.c.b16 %v431, %v430
        %v448 = vunpack.c.l.b16 %v392
        %v449 = vunpack.c.l.b16 %v393
        %v450 = vunpack.c.l.b16 %v394
        %v451 = vunpack.c.l.b16 %v395
        %v452 = vunpack.c.l.b16 %v396
        %v453 = vunpack.c.l.b16 %v397
        %v454 = vunpack.c.l.b16 %v398
        %v455 = vunpack.c.l.b16 %v399
        %v456 = vpack.c.b16 %v449, %v448
        %v457 = vpack.c.b16 %v451, %v450
        %v458 = vpack.c.b16 %v453, %v452
        %v459 = vpack.c.b16 %v455, %v454
        %vm460 = vcmask 130048
        %v462 = vsel %vm460, %v432, 0
        %v465 = vsel %vm460, %v433, 0
        %v468 = vsel %vm460, %v434, 0
        %v471 = vsel %vm460, %v435, 0
        %v474 = vsel %vm460, %v436, 0
        %v477 = vsel %vm460, %v437, 0
        %v480 = vsel %vm460, %v438, 0
        %v483 = vsel %vm460, %v439, 0
        %v486 = vsel %vm460, %v456, 0
        %v489 = vsel %vm460, %v457, 0
        %v492 = vsel %vm460, %v458, 0
        %v495 = vsel %vm460, %v459, 0
        %497 = vmatprep.subr.bf16.mxu0 0
        %498 = vmatpush1.bf16.xpose.msra.mxu0 %v486
        %499 = vmatprep.subr.bf16.mxu0 0
        %500 = vmatpush1.bf16.xpose.msra.mxu0 %v489
        %501 = vmatprep.subr.bf16.mxu0 0
        %502 = vmatpush1.bf16.xpose.msra.mxu0 %v492
        %503 = vmatprep.subr.bf16.mxu0 0
        %504 = vmatpush1.bf16.xpose.msra.mxu0 %v495
        %505 = vmatprep.subr.bf16.mxu0 0
        %506 = vmatpush1.bf16.xpose.msra.mxu0 0
        %507 = vmatprep.subr.bf16.mxu0 0
        %508 = vmatpush1.bf16.xpose.msra.mxu0 0
        %509 = vmatprep.subr.bf16.mxu0 0
        %510 = vmatpush1.bf16.xpose.msra.mxu0 0
        %511 = vmatprep.subr.bf16.mxu0 0
        %512 = vmatpush1.bf16.xpose.msra.mxu0 0
        %513 = vmatprep.subr.bf16.mxu0 0
        %514 = vmatpush1.bf16.xpose.msra.mxu0 0
        %515 = vmatprep.subr.bf16.mxu0 0
        %516 = vmatpush1.bf16.xpose.msra.mxu0 0
        %517 = vmatprep.subr.bf16.mxu0 0
        %518 = vmatpush1.bf16.xpose.msra.mxu0 0
        %519 = vmatprep.subr.bf16.mxu0 0
        %520 = vmatpush1.bf16.xpose.msra.mxu0 0
        %521 = vmatprep.subr.bf16.mxu0 0
        %522 = vmatpush1.bf16.xpose.msra.mxu0 0
        %523 = vmatprep.subr.bf16.mxu0 0
        %524 = vmatpush1.bf16.xpose.msra.mxu0 0
        %525 = vmatprep.subr.bf16.mxu0 0
        %526 = vmatpush1.bf16.xpose.msra.mxu0 0
        %527 = vmatprep.subr.bf16.mxu0 0
        %528 = vmatpush1.bf16.xpose.msra.mxu0 0
        %529 = vmatprep.mubr.bf16.mxu0 0
        %530 = vmatmul.mubr.bf16.gmra.mrb[0].mxu0 %v462
        %v531 = vpop.f32.mrb[0].mxu0
        %v532 = vadd.f32 0.0, %v531
        %v533 = vpop.f32.mrb[0].mxu0
        %v534 = vpop.f32.mrb[0].mxu0
        %v535 = vadd.f32 0.0, %v534
        %v536 = vpop.f32.mrb[0].mxu0
        %537 = vmatprep.mubr.bf16.mxu0 0
        %538 = vmatmul.mubr.bf16.gmra.mrb[0].mxu0 %v465
        %v539 = vpop.f32.mrb[0].mxu0
        %v540 = vadd.f32 0.0, %v539
        %v541 = vpop.f32.mrb[0].mxu0
        %v542 = vpop.f32.mrb[0].mxu0
        %v543 = vadd.f32 0.0, %v542
        %v544 = vpop.f32.mrb[0].mxu0
        %545 = vmatprep.mubr.bf16.mxu0 0
        %546 = vmatmul.mubr.bf16.gmra.mrb[0].mxu0 %v468
        %v547 = vpop.f32.mrb[0].mxu0
        %v548 = vadd.f32 0.0, %v547
        %v549 = vpop.f32.mrb[0].mxu0
        %v550 = vpop.f32.mrb[0].mxu0
        %v551 = vadd.f32 0.0, %v550
        %v552 = vpop.f32.mrb[0].mxu0
        %553 = vmatprep.mubr.bf16.mxu0 0
        %554 = vmatmul.mubr.bf16.gmra.mrb[0].mxu0 %v471
        %v555 = vpop.f32.mrb[0].mxu0
        %v556 = vadd.f32 0.0, %v555
        %v557 = vpop.f32.mrb[0].mxu0
        %v558 = vpop.f32.mrb[0].mxu0
        %v559 = vadd.f32 0.0, %v558
        %v560 = vpop.f32.mrb[0].mxu0
        %561 = vmatprep.mubr.bf16.mxu0 0
        %562 = vmatmul.mubr.bf16.gmra.mrb[0].mxu0 %v474
        %v563 = vpop.f32.mrb[0].mxu0
        %v564 = vadd.f32 0.0, %v563
        %v565 = vpop.f32.mrb[0].mxu0
        %v566 = vpop.f32.mrb[0].mxu0
        %v567 = vadd.f32 0.0, %v566
        %v568 = vpop.f32.mrb[0].mxu0
        %569 = vmatprep.mubr.bf16.mxu0 0
        %570 = vmatmul.mubr.bf16.gmra.mrb[0].mxu0 %v477
        %v571 = vpop.f32.mrb[0].mxu0
        %v572 = vadd.f32 0.0, %v571
        %v573 = vpop.f32.mrb[0].mxu0
        %v574 = vpop.f32.mrb[0].mxu0
        %v575 = vadd.f32 0.0, %v574
        %v576 = vpop.f32.mrb[0].mxu0
        %577 = vmatprep.mubr.bf16.mxu0 0
        %578 = vmatmul.mubr.bf16.gmra.mrb[0].mxu0 %v480
        %v579 = vpop.f32.mrb[0].mxu0
        %v580 = vadd.f32 0.0, %v579
        %v581 = vpop.f32.mrb[0].mxu0
        %v582 = vpop.f32.mrb[0].mxu0
        %v583 = vadd.f32 0.0, %v582
        %v584 = vpop.f32.mrb[0].mxu0
        %585 = vmatprep.mubr.bf16.mxu0 0
        %586 = vmatmul.mubr.bf16.gmra.mrb[0].mxu0 %v483
        %v587 = vpop.f32.mrb[0].mxu0
        %v588 = vadd.f32 0.0, %v587
        %v589 = vpop.f32.mrb[0].mxu0
        %v590 = vpop.f32.mrb[0].mxu0
        %v591 = vadd.f32 0.0, %v590
        %v592 = vpop.f32.mrb[0].mxu0
        %593 = vdwg.mxu0
        %v594 = vmul.f32 %v532, 30.0
        %v595 = vmul.f32 %v535, 30.0
        %v596 = vmul.f32 %v540, 30.0
        %v597 = vmul.f32 %v543, 30.0
        %v598 = vmul.f32 %v548, 30.0
        %v599 = vmul.f32 %v551, 30.0
        %v600 = vmul.f32 %v556, 30.0
        %v601 = vmul.f32 %v559, 30.0
        %v602 = vmul.f32 %v564, 30.0
        %v603 = vmul.f32 %v567, 30.0
        %v604 = vmul.f32 %v572, 30.0
        %v605 = vmul.f32 %v575, 30.0
        %v606 = vmul.f32 %v580, 30.0
        %v607 = vmul.f32 %v583, 30.0
        %v608 = vmul.f32 %v588, 30.0
        %v609 = vmul.f32 %v591, 30.0
        %vm610 = vcmask 523264
        %v611 = vsel %vm610, %v594, -inf
        %v612 = vsel %vm610, %v595, -inf
        %v613 = vsel %vm610, %v596, -inf
        %v614 = vsel %vm610, %v597, -inf
        %v615 = vsel %vm610, %v598, -inf
        %v616 = vmax.f32 %v611, %v615
        %v617 = vsel %vm610, %v599, -inf
        %v618 = vmax.f32 %v612, %v617
        %v619 = vsel %vm610, %v600, -inf
        %v620 = vmax.f32 %v613, %v619
        %v621 = vsel %vm610, %v601, -inf
        %v622 = vmax.f32 %v614, %v621
        %v623 = vsel %vm610, %v602, -inf
        %v624 = vmax.f32 %v616, %v623
        %v625 = vsel %vm610, %v603, -inf
        %v626 = vmax.f32 %v618, %v625
        %v627 = vsel %vm610, %v604, -inf
        %v628 = vmax.f32 %v620, %v627
        %v629 = vsel %vm610, %v605, -inf
        %v630 = vmax.f32 %v622, %v629
        %v631 = vsel %vm610, %v606, -inf
        %v632 = vmax.f32 %v624, %v631
        %v633 = vsel %vm610, %v607, -inf
        %v634 = vmax.f32 %v626, %v633
        %v635 = vsel %vm610, %v608, -inf
        %v636 = vmax.f32 %v628, %v635
        %v637 = vsel %vm610, %v609, -inf
        %v638 = vmax.f32 %v630, %v637
        %v639 = vmax.f32 %v632, %v634
        %v640 = vmax.f32 %v636, %v638
        %v641 = vmax.f32 %v639, %v640
        %v642 = vrot.slane %v641, 4
        %v643 = vmax.f32 %v641, %v642
        %v644 = vrot.slane %v643, 2
        %v645 = vmax.f32 %v643, %v644
        %v646 = vrot.slane %v645, 1
        %v647 = vmax.f32 %v645, %v646
        %v648 = vsub.f32 %v594, %v647
        %v649 = vsub.f32 %v595, %v647
        %v650 = vsub.f32 %v596, %v647
        %v651 = vsub.f32 %v597, %v647
        %v652 = vsub.f32 %v598, %v647
        %v653 = vsub.f32 %v599, %v647
        %v654 = vsub.f32 %v600, %v647
        %v655 = vsub.f32 %v601, %v647
        %v656 = vsub.f32 %v602, %v647
        %v657 = vsub.f32 %v603, %v647
        %v658 = vsub.f32 %v604, %v647
        %v659 = vsub.f32 %v605, %v647
        %v660 = vsub.f32 %v606, %v647
        %v661 = vsub.f32 %v607, %v647
        %v662 = vsub.f32 %v608, %v647
        %v663 = vsub.f32 %v609, %v647
        %v664 = vmul.f32 %v648, 1.442695
        %v665 = vpow.pop %v664
        %v666 = vmul.f32 %v649, 1.442695
        %v667 = vpow.pop %v666
        %v668 = vmul.f32 %v650, 1.442695
        %v669 = vpow.pop %v668
        %v670 = vmul.f32 %v651, 1.442695
        %v671 = vpow.pop %v670
        %v672 = vmul.f32 %v652, 1.442695
        %v673 = vpow.pop %v672
        %v674 = vmul.f32 %v653, 1.442695
        %v675 = vpow.pop %v674
        %v676 = vmul.f32 %v654, 1.442695
        %v677 = vpow.pop %v676
        %v678 = vmul.f32 %v655, 1.442695
        %v679 = vpow.pop %v678
        %v680 = vmul.f32 %v656, 1.442695
        %v681 = vpow.pop %v680
        %v682 = vmul.f32 %v657, 1.442695
        %v683 = vpow.pop %v682
        %v684 = vmul.f32 %v658, 1.442695
        %v685 = vpow.pop %v684
        %v686 = vmul.f32 %v659, 1.442695
        %v687 = vpow.pop %v686
        %v688 = vmul.f32 %v660, 1.442695
        %v689 = vpow.pop %v688
        %v690 = vmul.f32 %v661, 1.442695
        %v691 = vpow.pop %v690
        %v692 = vmul.f32 %v662, 1.442695
        %v693 = vpow.pop %v692
        %v694 = vmul.f32 %v663, 1.442695
        %v695 = vpow.pop %v694
        %v696 = vsel %vm610, %v665, 0.0
        %v697 = vsel %vm610, %v667, 0.0
        %v698 = vadd.f32 %v696, %v697
        %v699 = vsel %vm610, %v669, 0.0
        %v700 = vadd.f32 %v698, %v699
        %v701 = vsel %vm610, %v671, 0.0
        %v702 = vadd.f32 %v700, %v701
        %v703 = vsel %vm610, %v673, 0.0
        %v704 = vadd.f32 %v702, %v703
        %v705 = vsel %vm610, %v675, 0.0
        %v706 = vadd.f32 %v704, %v705
        %v707 = vsel %vm610, %v677, 0.0
        %v708 = vadd.f32 %v706, %v707
        %v709 = vsel %vm610, %v679, 0.0
        %v710 = vadd.f32 %v708, %v709
        %v711 = vsel %vm610, %v681, 0.0
        %v712 = vadd.f32 %v710, %v711
        %v713 = vsel %vm610, %v683, 0.0
        %v714 = vadd.f32 %v712, %v713
        %v715 = vsel %vm610, %v685, 0.0
        %v716 = vadd.f32 %v714, %v715
        %v717 = vsel %vm610, %v687, 0.0
        %v718 = vadd.f32 %v716, %v717
        %v719 = vsel %vm610, %v689, 0.0
        %v720 = vadd.f32 %v718, %v719
        %v721 = vsel %vm610, %v691, 0.0
        %v722 = vadd.f32 %v720, %v721
        %v723 = vsel %vm610, %v693, 0.0
        %v724 = vadd.f32 %v722, %v723
        %v725 = vsel %vm610, %v695, 0.0
        %v726 = vadd.f32 %v724, %v725
        %v727 = vrot.slane %v726, 4
        %v728 = vadd.f32 %v726, %v727
        %v729 = vrot.slane %v728, 2
        %v730 = vadd.f32 %v728, %v729
        %v731 = vrot.slane %v730, 1
        %v732 = vadd.f32 %v730, %v731
        %v733 = vpack.c.bf16 %v667, %v665
        %v734 = vpack.c.bf16 %v671, %v669
        %v735 = vpack.c.bf16 %v675, %v673
        %v736 = vpack.c.bf16 %v679, %v677
        %v737 = vpack.c.bf16 %v683, %v681
        %v738 = vpack.c.bf16 %v687, %v685
        %v739 = vpack.c.bf16 %v691, %v689
        %v740 = vpack.c.bf16 %v695, %v693
        %v741 = vld [vmem:[%s326] sm:$0xf]
        %v742 = vld [vmem:[%s326 + $0x4] sm:$0xf]
        %v743 = vld [vmem:[%s326 + $0x8] sm:$0xf]
        %v744 = vld [vmem:[%s326 + $0xc] sm:$0xf]
        %s745 = scalar_lea.vmem %s326, 16 [#allocation2]
        %v746 = vld [vmem:[%s745] sm:$0xf]
        %v747 = vld [vmem:[%s745 + $0x4] sm:$0xf]
        %v748 = vld [vmem:[%s745 + $0x8] sm:$0xf]
        %v749 = vld [vmem:[%s745 + $0xc] sm:$0xf]
        %v754 = vunpack.c.l.b16 %v746
        %v755 = vunpack.c.l.b16 %v747
        %v756 = vunpack.c.l.b16 %v748
        %v757 = vunpack.c.l.b16 %v749
        %v758 = vpack.c.b16 %v755, %v754
        %v759 = vpack.c.b16 %v757, %v756
        %v761 = vsel %vm610, %v758, 0
        %v764 = vsel %vm610, %v759, 0
        %766 = vmatprep.subr.bf16.mxu0 0
        %767 = vmatpush1.bf16.msra.mxu0 %v737
        %768 = vmatprep.subr.bf16.mxu0 0
        %769 = vmatpush1.bf16.msra.mxu0 %v738
        %770 = vmatprep.subr.bf16.mxu0 0
        %771 = vmatpush1.bf16.msra.mxu0 %v739
        %772 = vmatprep.subr.bf16.mxu0 0
        %773 = vmatpush1.bf16.msra.mxu0 %v740
        %774 = vmatprep.subr.bf16.mxu0 0
        %775 = vmatpush1.bf16.msra.mxu0 0
        %776 = vmatprep.subr.bf16.mxu0 0
        %777 = vmatpush1.bf16.msra.mxu0 0
        %778 = vmatprep.subr.bf16.mxu0 0
        %779 = vmatpush1.bf16.msra.mxu0 0
        %780 = vmatprep.subr.bf16.mxu0 0
        %781 = vmatpush1.bf16.msra.mxu0 0
        %782 = vmatprep.subr.bf16.mxu0 0
        %783 = vmatpush1.bf16.msra.mxu0 0
        %784 = vmatprep.subr.bf16.mxu0 0
        %785 = vmatpush1.bf16.msra.mxu0 0
        %786 = vmatprep.subr.bf16.mxu0 0
        %787 = vmatpush1.bf16.msra.mxu0 0
        %788 = vmatprep.subr.bf16.mxu0 0
        %789 = vmatpush1.bf16.msra.mxu0 0
        %790 = vmatprep.subr.bf16.mxu0 0
        %791 = vmatpush1.bf16.msra.mxu0 0
        %792 = vmatprep.subr.bf16.mxu0 0
        %793 = vmatpush1.bf16.msra.mxu0 0
        %794 = vmatprep.subr.bf16.mxu0 0
        %795 = vmatpush1.bf16.msra.mxu0 0
        %796 = vmatprep.subr.bf16.mxu0 0
        %797 = vmatpush1.bf16.msra.mxu0 0
        %798 = vmatprep.mubr.bf16.mxu0 0
        %799 = vmatmul.mubr.bf16.gmra.mrb[0].mxu0 %v761
        %v800 = vpop.f32.mrb[0].mxu0
        %v801 = vadd.f32 0.0, %v800
        %v802 = vpop.f32.mrb[0].mxu0
        %v803 = vpop.f32.mrb[0].mxu0
        %v804 = vadd.f32 0.0, %v803
        %v805 = vpop.f32.mrb[0].mxu0
        %806 = vmatprep.mubr.bf16.mxu0 0
        %807 = vmatmul.mubr.bf16.gmra.mrb[0].mxu0 %v764
        %v808 = vpop.f32.mrb[0].mxu0
        %v809 = vadd.f32 0.0, %v808
        %v810 = vpop.f32.mrb[0].mxu0
        %v811 = vpop.f32.mrb[0].mxu0
        %v812 = vadd.f32 0.0, %v811
        %v813 = vpop.f32.mrb[0].mxu0
        %814 = vdwg.mxu0
        %v819 = vunpack.c.l.b16 %v741
        %v820 = vunpack.c.l.b16 %v742
        %v821 = vunpack.c.l.b16 %v743
        %v822 = vunpack.c.l.b16 %v744
        %v823 = vpack.c.b16 %v820, %v819
        %v824 = vpack.c.b16 %v822, %v821
        %v826 = vsel %vm610, %v823, 0
        %v829 = vsel %vm610, %v824, 0
        %831 = vmatprep.subr.bf16.mxu0 0
        %832 = vmatpush1.bf16.msra.mxu0 %v733
        %833 = vmatprep.subr.bf16.mxu0 0
        %834 = vmatpush1.bf16.msra.mxu0 %v734
        %835 = vmatprep.subr.bf16.mxu0 0
        %836 = vmatpush1.bf16.msra.mxu0 %v735
        %837 = vmatprep.subr.bf16.mxu0 0
        %838 = vmatpush1.bf16.msra.mxu0 %v736
        %839 = vmatprep.subr.bf16.mxu0 0
        %840 = vmatpush1.bf16.msra.mxu0 0
        %841 = vmatprep.subr.bf16.mxu0 0
        %842 = vmatpush1.bf16.msra.mxu0 0
        %843 = vmatprep.subr.bf16.mxu0 0
        %844 = vmatpush1.bf16.msra.mxu0 0
        %845 = vmatprep.subr.bf16.mxu0 0
        %846 = vmatpush1.bf16.msra.mxu0 0
        %847 = vmatprep.subr.bf16.mxu0 0
        %848 = vmatpush1.bf16.msra.mxu0 0
        %849 = vmatprep.subr.bf16.mxu0 0
        %850 = vmatpush1.bf16.msra.mxu0 0
        %851 = vmatprep.subr.bf16.mxu0 0
        %852 = vmatpush1.bf16.msra.mxu0 0
        %853 = vmatprep.subr.bf16.mxu0 0
        %854 = vmatpush1.bf16.msra.mxu0 0
        %855 = vmatprep.subr.bf16.mxu0 0
        %856 = vmatpush1.bf16.msra.mxu0 0
        %857 = vmatprep.subr.bf16.mxu0 0
        %858 = vmatpush1.bf16.msra.mxu0 0
        %859 = vmatprep.subr.bf16.mxu0 0
        %860 = vmatpush1.bf16.msra.mxu0 0
        %861 = vmatprep.subr.bf16.mxu0 0
        %862 = vmatpush1.bf16.msra.mxu0 0
        %863 = vmatprep.mubr.bf16.mxu0 0
        %864 = vmatmul.mubr.bf16.gmra.mrb[0].mxu0 %v826
        %v865 = vpop.f32.mrb[0].mxu0
        %v866 = vadd.f32 %v801, %v865
        %v867 = vpop.f32.mrb[0].mxu0
        %v868 = vpop.f32.mrb[0].mxu0
        %v869 = vadd.f32 %v804, %v868
        %v870 = vpop.f32.mrb[0].mxu0
        %871 = vmatprep.mubr.bf16.mxu0 0
        %872 = vmatmul.mubr.bf16.gmra.mrb[0].mxu0 %v829
        %v873 = vpop.f32.mrb[0].mxu0
        %v874 = vadd.f32 %v809, %v873
        %v875 = vpop.f32.mrb[0].mxu0
        %v876 = vpop.f32.mrb[0].mxu0
        %v877 = vadd.f32 %v812, %v876
        %v878 = vpop.f32.mrb[0].mxu0
        %879 = vdwg.mxu0
        %v880 = vrcp.pop %v732
        %v881 = vmul.f32 %v866, %v880
        %v882 = vmul.f32 %v869, %v880
        %v883 = vmul.f32 %v874, %v880
        %v884 = vmul.f32 %v877, %v880
        %v885 = vld [vmem:[%s333] sm:$0xf]
        %v886 = vld [vmem:[%s333 + $0x4] sm:$0xf]
        %v887 = vld [vmem:[%s333 + $0x8] sm:$0xf]
        %v888 = vld [vmem:[%s333 + $0xc] sm:$0xf]
        %v889 = vunpack.c.l.bf16 %v885
        %v890 = vunpack.c.l.bf16 %v886
        %v891 = vunpack.c.l.bf16 %v887
        %v892 = vunpack.c.l.bf16 %v888
        %v893 = vadd.f32 %v889, %v881
        %v894 = vadd.f32 %v890, %v882
        %v895 = vadd.f32 %v891, %v883
        %v896 = vadd.f32 %v892, %v884
        %v897 = vsel %vm610, %v893, 0.0
        %898 = vadd.xlane.f32.xlu0 %v897
        %v899 = vpop.xlane.xlu0 %898
        %v900 = vsel %vm610, %v894, 0.0
        %901 = vadd.xlane.f32.xlu0 %v900
        %v902 = vpop.xlane.xlu0 %901
        %v903 = vsel %vm610, %v895, 0.0
        %904 = vadd.xlane.f32.xlu0 %v903
        %v905 = vpop.xlane.xlu0 %904
        %v906 = vsel %vm610, %v896, 0.0
        %907 = vadd.xlane.f32.xlu0 %v906
        %v908 = vpop.xlane.xlu0 %907
        %v909 = vrcp.pop 64.0
        %v910 = vmul.f32 %v899, %v909
        %v911 = vmul.f32 %v902, %v909
        %v912 = vmul.f32 %v905, %v909
        %v913 = vmul.f32 %v908, %v909
        %v914 = vsub.f32 %v893, %v910
        %v915 = vsub.f32 %v894, %v911
        %v916 = vsub.f32 %v895, %v912
        %v917 = vsub.f32 %v896, %v913
        %v918 = vmul.f32 %v914, %v914
        %v919 = vmul.f32 %v915, %v915
        %v920 = vmul.f32 %v916, %v916
        %v921 = vmul.f32 %v917, %v917
        %v922 = vsel %vm610, %v918, 0.0
        %923 = vadd.xlane.f32.xlu0 %v922
        %v924 = vpop.xlane.xlu0 %923
        %v925 = vsel %vm610, %v919, 0.0
        %926 = vadd.xlane.f32.xlu0 %v925
        %v927 = vpop.xlane.xlu0 %926
        %v928 = vsel %vm610, %v920, 0.0
        %929 = vadd.xlane.f32.xlu0 %v928
        %v930 = vpop.xlane.xlu0 %929
        %v931 = vsel %vm610, %v921, 0.0
        %932 = vadd.xlane.f32.xlu0 %v931
        %v933 = vpop.xlane.xlu0 %932
        %v934 = vmul.f32 %v924, %v909
        %v935 = vmul.f32 %v927, %v909
        %v936 = vmul.f32 %v930, %v909
        %v937 = vmul.f32 %v933, %v909
        %v938 = vadd.f32 %v934, 1e-05
        %v939 = vadd.f32 %v935, 1e-05
        %v940 = vadd.f32 %v936, 1e-05
        %v941 = vadd.f32 %v937, 1e-05
        %v942 = vrsqrt.pop %v938
        %v943 = vrsqrt.pop %v939
        %v944 = vrsqrt.pop %v940
        %v945 = vrsqrt.pop %v941
        %v946 = vmul.f32 %v914, %v942
        %v947 = vmul.f32 %v915, %v943
        %v948 = vmul.f32 %v916, %v944
        %v949 = vmul.f32 %v917, %v945
        %v950 = vpack.c.bf16 %v947, %v946
        %v951 = vpack.c.bf16 %v949, %v948
        %v954 = vunpack.c.l.b16 %v950
        %v955 = vunpack.c.h.b16 %v950
        %v956 = vunpack.c.l.b16 %v951
        %v957 = vunpack.c.h.b16 %v951
        %v958 = vpack.c.b16 %v954, %v954
        %v959 = vpack.c.b16 %v955, %v955
        %v960 = vpack.c.b16 %v956, %v956
        %v961 = vpack.c.b16 %v957, %v957
        %vm966 = vcmask 519168
        %967 = vst.msk [vmem:[%s362] sm:$0xf] %vm966, %v958
        %968 = vst.msk [vmem:[%s362 + $0x4] sm:$0xf] %vm966, %v959
        %969 = vst.msk [vmem:[%s362 + $0x8] sm:$0xf] %vm966, %v960
        %970 = vst.msk [vmem:[%s362 + $0xc] sm:$0xf] %vm966, %v961
        %s971 = sadd.s32 %s387, 64
        %s972 = sshra.s32 %s971, 3
        %s973 = sand.u32 %s971, 7
        %s974 = smul.addr %s972, 4
        %s975 = scalar_lea.vmem %s367, %s974
        %v976 = vld [vmem:[%s975] sm:$0xf]
        %v977 = vld [vmem:[%s975 + $0x4] sm:$0xf]
        %v978 = vld [vmem:[%s975 + $0x8] sm:$0xf]
        %v979 = vld [vmem:[%s975 + $0xc] sm:$0xf]
        %v980 = vld [vmem:[%s975 + $0x10] sm:$0xf]
        %v981 = vld [vmem:[%s975 + $0x14] sm:$0xf]
        %v982 = vld [vmem:[%s975 + $0x18] sm:$0xf]
        %v983 = vld [vmem:[%s975 + $0x1c] sm:$0xf]
        %v992 = vunpack.c.l.b16 %v976
        %v993 = vunpack.c.l.b16 %v977
        %v994 = vunpack.c.l.b16 %v978
        %v995 = vunpack.c.l.b16 %v979
        %v996 = vunpack.c.l.b16 %v980
        %v997 = vunpack.c.l.b16 %v981
        %v998 = vunpack.c.l.b16 %v982
        %v999 = vunpack.c.l.b16 %v983
        %v1000 = vpack.c.b16 %v993, %v992
        %v1001 = vpack.c.b16 %v995, %v994
        %v1002 = vpack.c.b16 %v997, %v996
        %v1003 = vpack.c.b16 %v999, %v998
        %v1005 = vsel %vm460, %v1000, 0
        %v1008 = vsel %vm460, %v1001, 0
        %v1011 = vsel %vm460, %v1002, 0
        %v1014 = vsel %vm460, %v1003, 0
        %1016 = vmatprep.subr.bf16.mxu0 0
        %1017 = vmatpush1.bf16.xpose.msra.mxu0 %v1005
        %1018 = vmatprep.subr.bf16.mxu0 0
        %1019 = vmatpush1.bf16.xpose.msra.mxu0 %v1008
        %1020 = vmatprep.subr.bf16.mxu0 0
        %1021 = vmatpush1.bf16.xpose.msra.mxu0 %v1011
        %1022 = vmatprep.subr.bf16.mxu0 0
        %1023 = vmatpush1.bf16.xpose.msra.mxu0 %v1014
        %1024 = vmatprep.subr.bf16.mxu0 0
        %1025 = vmatpush1.bf16.xpose.msra.mxu0 0
        %1026 = vmatprep.subr.bf16.mxu0 0
        %1027 = vmatpush1.bf16.xpose.msra.mxu0 0
        %1028 = vmatprep.subr.bf16.mxu0 0
        %1029 = vmatpush1.bf16.xpose.msra.mxu0 0
        %1030 = vmatprep.subr.bf16.mxu0 0
        %1031 = vmatpush1.bf16.xpose.msra.mxu0 0
        %1032 = vmatprep.subr.bf16.mxu0 0
        %1033 = vmatpush1.bf16.xpose.msra.mxu0 0
        %1034 = vmatprep.subr.bf16.mxu0 0
        %1035 = vmatpush1.bf16.xpose.msra.mxu0 0
        %1036 = vmatprep.subr.bf16.mxu0 0
        %1037 = vmatpush1.bf16.xpose.msra.mxu0 0
        %1038 = vmatprep.subr.bf16.mxu0 0
        %1039 = vmatpush1.bf16.xpose.msra.mxu0 0
        %1040 = vmatprep.subr.bf16.mxu0 0
        %1041 = vmatpush1.bf16.xpose.msra.mxu0 0
        %1042 = vmatprep.subr.bf16.mxu0 0
        %1043 = vmatpush1.bf16.xpose.msra.mxu0 0
        %1044 = vmatprep.subr.bf16.mxu0 0
        %1045 = vmatpush1.bf16.xpose.msra.mxu0 0
        %1046 = vmatprep.subr.bf16.mxu0 0
        %1047 = vmatpush1.bf16.xpose.msra.mxu0 0
        %1048 = vmatprep.mubr.bf16.mxu0 0
        %1049 = vmatmul.mubr.bf16.gmra.mrb[0].mxu0 %v462
        %v1050 = vpop.f32.mrb[0].mxu0
        %v1051 = vadd.f32 0.0, %v1050
        %v1052 = vpop.f32.mrb[0].mxu0
        %v1053 = vpop.f32.mrb[0].mxu0
        %v1054 = vadd.f32 0.0, %v1053
        %v1055 = vpop.f32.mrb[0].mxu0
        %1056 = vmatprep.mubr.bf16.mxu0 0
        %1057 = vmatmul.mubr.bf16.gmra.mrb[0].mxu0 %v465
        %v1058 = vpop.f32.mrb[0].mxu0
        %v1059 = vadd.f32 0.0, %v1058
        %v1060 = vpop.f32.mrb[0].mxu0
        %v1061 = vpop.f32.mrb[0].mxu0
        %v1062 = vadd.f32 0.0, %v1061
        %v1063 = vpop.f32.mrb[0].mxu0
        %1064 = vmatprep.mubr.bf16.mxu0 0
        %1065 = vmatmul.mubr.bf16.gmra.mrb[0].mxu0 %v468
        %v1066 = vpop.f32.mrb[0].mxu0
        %v1067 = vadd.f32 0.0, %v1066
        %v1068 = vpop.f32.mrb[0].mxu0
        %v1069 = vpop.f32.mrb[0].mxu0
        %v1070 = vadd.f32 0.0, %v1069
        %v1071 = vpop.f32.mrb[0].mxu0
        %1072 = vmatprep.mubr.bf16.mxu0 0
        %1073 = vmatmul.mubr.bf16.gmra.mrb[0].mxu0 %v471
        %v1074 = vpop.f32.mrb[0].mxu0
        %v1075 = vadd.f32 0.0, %v1074
        %v1076 = vpop.f32.mrb[0].mxu0
        %v1077 = vpop.f32.mrb[0].mxu0
        %v1078 = vadd.f32 0.0, %v1077
        %v1079 = vpop.f32.mrb[0].mxu0
        %1080 = vmatprep.mubr.bf16.mxu0 0
        %1081 = vmatmul.mubr.bf16.gmra.mrb[0].mxu0 %v474
        %v1082 = vpop.f32.mrb[0].mxu0
        %v1083 = vadd.f32 0.0, %v1082
        %v1084 = vpop.f32.mrb[0].mxu0
        %v1085 = vpop.f32.mrb[0].mxu0
        %v1086 = vadd.f32 0.0, %v1085
        %v1087 = vpop.f32.mrb[0].mxu0
        %1088 = vmatprep.mubr.bf16.mxu0 0
        %1089 = vmatmul.mubr.bf16.gmra.mrb[0].mxu0 %v477
        %v1090 = vpop.f32.mrb[0].mxu0
        %v1091 = vadd.f32 0.0, %v1090
        %v1092 = vpop.f32.mrb[0].mxu0
        %v1093 = vpop.f32.mrb[0].mxu0
        %v1094 = vadd.f32 0.0, %v1093
        %v1095 = vpop.f32.mrb[0].mxu0
        %1096 = vmatprep.mubr.bf16.mxu0 0
        %1097 = vmatmul.mubr.bf16.gmra.mrb[0].mxu0 %v480
        %v1098 = vpop.f32.mrb[0].mxu0
        %v1099 = vadd.f32 0.0, %v1098
        %v1100 = vpop.f32.mrb[0].mxu0
        %v1101 = vpop.f32.mrb[0].mxu0
        %v1102 = vadd.f32 0.0, %v1101
        %v1103 = vpop.f32.mrb[0].mxu0
        %1104 = vmatprep.mubr.bf16.mxu0 0
        %1105 = vmatmul.mubr.bf16.gmra.mrb[0].mxu0 %v483
        %v1106 = vpop.f32.mrb[0].mxu0
        %v1107 = vadd.f32 0.0, %v1106
        %v1108 = vpop.f32.mrb[0].mxu0
        %v1109 = vpop.f32.mrb[0].mxu0
        %v1110 = vadd.f32 0.0, %v1109
        %v1111 = vpop.f32.mrb[0].mxu0
        %1112 = vdwg.mxu0
        %v1113 = vmul.f32 %v1051, 30.0
        %v1114 = vmul.f32 %v1054, 30.0
        %v1115 = vmul.f32 %v1059, 30.0
        %v1116 = vmul.f32 %v1062, 30.0
        %v1117 = vmul.f32 %v1067, 30.0
        %v1118 = vmul.f32 %v1070, 30.0
        %v1119 = vmul.f32 %v1075, 30.0
        %v1120 = vmul.f32 %v1078, 30.0
        %v1121 = vmul.f32 %v1083, 30.0
        %v1122 = vmul.f32 %v1086, 30.0
        %v1123 = vmul.f32 %v1091, 30.0
        %v1124 = vmul.f32 %v1094, 30.0
        %v1125 = vmul.f32 %v1099, 30.0
        %v1126 = vmul.f32 %v1102, 30.0
        %v1127 = vmul.f32 %v1107, 30.0
        %v1128 = vmul.f32 %v1110, 30.0
        %v1129 = vsel %vm610, %v1113, -inf
        %v1130 = vsel %vm610, %v1114, -inf
        %v1131 = vsel %vm610, %v1115, -inf
        %v1132 = vsel %vm610, %v1116, -inf
        %v1133 = vsel %vm610, %v1117, -inf
        %v1134 = vmax.f32 %v1129, %v1133
        %v1135 = vsel %vm610, %v1118, -inf
        %v1136 = vmax.f32 %v1130, %v1135
        %v1137 = vsel %vm610, %v1119, -inf
        %v1138 = vmax.f32 %v1131, %v1137
        %v1139 = vsel %vm610, %v1120, -inf
        %v1140 = vmax.f32 %v1132, %v1139
        %v1141 = vsel %vm610, %v1121, -inf
        %v1142 = vmax.f32 %v1134, %v1141
        %v1143 = vsel %vm610, %v1122, -inf
        %v1144 = vmax.f32 %v1136, %v1143
        %v1145 = vsel %vm610, %v1123, -inf
        %v1146 = vmax.f32 %v1138, %v1145
        %v1147 = vsel %vm610, %v1124, -inf
        %v1148 = vmax.f32 %v1140, %v1147
        %v1149 = vsel %vm610, %v1125, -inf
        %v1150 = vmax.f32 %v1142, %v1149
        %v1151 = vsel %vm610, %v1126, -inf
        %v1152 = vmax.f32 %v1144, %v1151
        %v1153 = vsel %vm610, %v1127, -inf
        %v1154 = vmax.f32 %v1146, %v1153
        %v1155 = vsel %vm610, %v1128, -inf
        %v1156 = vmax.f32 %v1148, %v1155
        %v1157 = vmax.f32 %v1150, %v1152
        %v1158 = vmax.f32 %v1154, %v1156
        %v1159 = vmax.f32 %v1157, %v1158
        %v1160 = vrot.slane %v1159, 4
        %v1161 = vmax.f32 %v1159, %v1160
        %v1162 = vrot.slane %v1161, 2
        %v1163 = vmax.f32 %v1161, %v1162
        %v1164 = vrot.slane %v1163, 1
        %v1165 = vmax.f32 %v1163, %v1164
        %v1166 = vsub.f32 %v1113, %v1165
        %v1167 = vsub.f32 %v1114, %v1165
        %v1168 = vsub.f32 %v1115, %v1165
        %v1169 = vsub.f32 %v1116, %v1165
        %v1170 = vsub.f32 %v1117, %v1165
        %v1171 = vsub.f32 %v1118, %v1165
        %v1172 = vsub.f32 %v1119, %v1165
        %v1173 = vsub.f32 %v1120, %v1165
        %v1174 = vsub.f32 %v1121, %v1165
        %v1175 = vsub.f32 %v1122, %v1165
        %v1176 = vsub.f32 %v1123, %v1165
        %v1177 = vsub.f32 %v1124, %v1165
        %v1178 = vsub.f32 %v1125, %v1165
        %v1179 = vsub.f32 %v1126, %v1165
        %v1180 = vsub.f32 %v1127, %v1165
        %v1181 = vsub.f32 %v1128, %v1165
        %v1182 = vmul.f32 %v1166, 1.442695
        %v1183 = vpow.pop %v1182
        %v1184 = vmul.f32 %v1167, 1.442695
        %v1185 = vpow.pop %v1184
        %v1186 = vmul.f32 %v1168, 1.442695
        %v1187 = vpow.pop %v1186
        %v1188 = vmul.f32 %v1169, 1.442695
        %v1189 = vpow.pop %v1188
        %v1190 = vmul.f32 %v1170, 1.442695
        %v1191 = vpow.pop %v1190
        %v1192 = vmul.f32 %v1171, 1.442695
        %v1193 = vpow.pop %v1192
        %v1194 = vmul.f32 %v1172, 1.442695
        %v1195 = vpow.pop %v1194
        %v1196 = vmul.f32 %v1173, 1.442695
        %v1197 = vpow.pop %v1196
        %v1198 = vmul.f32 %v1174, 1.442695
        %v1199 = vpow.pop %v1198
        %v1200 = vmul.f32 %v1175, 1.442695
        %v1201 = vpow.pop %v1200
        %v1202 = vmul.f32 %v1176, 1.442695
        %v1203 = vpow.pop %v1202
        %v1204 = vmul.f32 %v1177, 1.442695
        %v1205 = vpow.pop %v1204
        %v1206 = vmul.f32 %v1178, 1.442695
        %v1207 = vpow.pop %v1206
        %v1208 = vmul.f32 %v1179, 1.442695
        %v1209 = vpow.pop %v1208
        %v1210 = vmul.f32 %v1180, 1.442695
        %v1211 = vpow.pop %v1210
        %v1212 = vmul.f32 %v1181, 1.442695
        %v1213 = vpow.pop %v1212
        %v1214 = vsel %vm610, %v1183, 0.0
        %v1215 = vsel %vm610, %v1185, 0.0
        %v1216 = vadd.f32 %v1214, %v1215
        %v1217 = vsel %vm610, %v1187, 0.0
        %v1218 = vadd.f32 %v1216, %v1217
        %v1219 = vsel %vm610, %v1189, 0.0
        %v1220 = vadd.f32 %v1218, %v1219
        %v1221 = vsel %vm610, %v1191, 0.0
        %v1222 = vadd.f32 %v1220, %v1221
        %v1223 = vsel %vm610, %v1193, 0.0
        %v1224 = vadd.f32 %v1222, %v1223
        %v1225 = vsel %vm610, %v1195, 0.0
        %v1226 = vadd.f32 %v1224, %v1225
        %v1227 = vsel %vm610, %v1197, 0.0
        %v1228 = vadd.f32 %v1226, %v1227
        %v1229 = vsel %vm610, %v1199, 0.0
        %v1230 = vadd.f32 %v1228, %v1229
        %v1231 = vsel %vm610, %v1201, 0.0
        %v1232 = vadd.f32 %v1230, %v1231
        %v1233 = vsel %vm610, %v1203, 0.0
        %v1234 = vadd.f32 %v1232, %v1233
        %v1235 = vsel %vm610, %v1205, 0.0
        %v1236 = vadd.f32 %v1234, %v1235
        %v1237 = vsel %vm610, %v1207, 0.0
        %v1238 = vadd.f32 %v1236, %v1237
        %v1239 = vsel %vm610, %v1209, 0.0
        %v1240 = vadd.f32 %v1238, %v1239
        %v1241 = vsel %vm610, %v1211, 0.0
        %v1242 = vadd.f32 %v1240, %v1241
        %v1243 = vsel %vm610, %v1213, 0.0
        %v1244 = vadd.f32 %v1242, %v1243
        %v1245 = vrot.slane %v1244, 4
        %v1246 = vadd.f32 %v1244, %v1245
        %v1247 = vrot.slane %v1246, 2
        %v1248 = vadd.f32 %v1246, %v1247
        %v1249 = vrot.slane %v1248, 1
        %v1250 = vadd.f32 %v1248, %v1249
        %v1251 = vpack.c.bf16 %v1185, %v1183
        %v1252 = vpack.c.bf16 %v1189, %v1187
        %v1253 = vpack.c.bf16 %v1193, %v1191
        %v1254 = vpack.c.bf16 %v1197, %v1195
        %v1255 = vpack.c.bf16 %v1201, %v1199
        %v1256 = vpack.c.bf16 %v1205, %v1203
        %v1257 = vpack.c.bf16 %v1209, %v1207
        %v1258 = vpack.c.bf16 %v1213, %v1211
        %v1259 = vld [vmem:[%s326] sm:$0xf]
        %v1260 = vld [vmem:[%s326 + $0x4] sm:$0xf]
        %v1261 = vld [vmem:[%s326 + $0x8] sm:$0xf]
        %v1262 = vld [vmem:[%s326 + $0xc] sm:$0xf]
        %v1263 = vld [vmem:[%s745] sm:$0xf]
        %v1264 = vld [vmem:[%s745 + $0x4] sm:$0xf]
        %v1265 = vld [vmem:[%s745 + $0x8] sm:$0xf]
        %v1266 = vld [vmem:[%s745 + $0xc] sm:$0xf]
        %v1271 = vunpack.c.l.b16 %v1263
        %v1272 = vunpack.c.l.b16 %v1264
        %v1273 = vunpack.c.l.b16 %v1265
        %v1274 = vunpack.c.l.b16 %v1266
        %v1275 = vpack.c.b16 %v1272, %v1271
        %v1276 = vpack.c.b16 %v1274, %v1273
        %v1278 = vsel %vm610, %v1275, 0
        %v1281 = vsel %vm610, %v1276, 0
        %1283 = vmatprep.subr.bf16.mxu0 0
        %1284 = vmatpush1.bf16.msra.mxu0 %v1255
        %1285 = vmatprep.subr.bf16.mxu0 0
        %1286 = vmatpush1.bf16.msra.mxu0 %v1256
        %1287 = vmatprep.subr.bf16.mxu0 0
        %1288 = vmatpush1.bf16.msra.mxu0 %v1257
        %1289 = vmatprep.subr.bf16.mxu0 0
        %1290 = vmatpush1.bf16.msra.mxu0 %v1258
        %1291 = vmatprep.subr.bf16.mxu0 0
        %1292 = vmatpush1.bf16.msra.mxu0 0
        %1293 = vmatprep.subr.bf16.mxu0 0
        %1294 = vmatpush1.bf16.msra.mxu0 0
        %1295 = vmatprep.subr.bf16.mxu0 0
        %1296 = vmatpush1.bf16.msra.mxu0 0
        %1297 = vmatprep.subr.bf16.mxu0 0
        %1298 = vmatpush1.bf16.msra.mxu0 0
        %1299 = vmatprep.subr.bf16.mxu0 0
        %1300 = vmatpush1.bf16.msra.mxu0 0
        %1301 = vmatprep.subr.bf16.mxu0 0
        %1302 = vmatpush1.bf16.msra.mxu0 0
        %1303 = vmatprep.subr.bf16.mxu0 0
        %1304 = vmatpush1.bf16.msra.mxu0 0
        %1305 = vmatprep.subr.bf16.mxu0 0
        %1306 = vmatpush1.bf16.msra.mxu0 0
        %1307 = vmatprep.subr.bf16.mxu0 0
        %1308 = vmatpush1.bf16.msra.mxu0 0
        %1309 = vmatprep.subr.bf16.mxu0 0
        %1310 = vmatpush1.bf16.msra.mxu0 0
        %1311 = vmatprep.subr.bf16.mxu0 0
        %1312 = vmatpush1.bf16.msra.mxu0 0
        %1313 = vmatprep.subr.bf16.mxu0 0
        %1314 = vmatpush1.bf16.msra.mxu0 0
        %1315 = vmatprep.mubr.bf16.mxu0 0
        %1316 = vmatmul.mubr.bf16.gmra.mrb[0].mxu0 %v1278
        %v1317 = vpop.f32.mrb[0].mxu0
        %v1318 = vadd.f32 0.0, %v1317
        %v1319 = vpop.f32.mrb[0].mxu0
        %v1320 = vpop.f32.mrb[0].mxu0
        %v1321 = vadd.f32 0.0, %v1320
        %v1322 = vpop.f32.mrb[0].mxu0
        %1323 = vmatprep.mubr.bf16.mxu0 0
        %1324 = vmatmul.mubr.bf16.gmra.mrb[0].mxu0 %v1281
        %v1325 = vpop.f32.mrb[0].mxu0
        %v1326 = vadd.f32 0.0, %v1325
        %v1327 = vpop.f32.mrb[0].mxu0
        %v1328 = vpop.f32.mrb[0].mxu0
        %v1329 = vadd.f32 0.0, %v1328
        %v1330 = vpop.f32.mrb[0].mxu0
        %1331 = vdwg.mxu0
        %v1336 = vunpack.c.l.b16 %v1259
        %v1337 = vunpack.c.l.b16 %v1260
        %v1338 = vunpack.c.l.b16 %v1261
        %v1339 = vunpack.c.l.b16 %v1262
        %v1340 = vpack.c.b16 %v1337, %v1336
        %v1341 = vpack.c.b16 %v1339, %v1338
        %v1343 = vsel %vm610, %v1340, 0
        %v1346 = vsel %vm610, %v1341, 0
        %1348 = vmatprep.subr.bf16.mxu0 0
        %1349 = vmatpush1.bf16.msra.mxu0 %v1251
        %1350 = vmatprep.subr.bf16.mxu0 0
        %1351 = vmatpush1.bf16.msra.mxu0 %v1252
        %1352 = vmatprep.subr.bf16.mxu0 0
        %1353 = vmatpush1.bf16.msra.mxu0 %v1253
        %1354 = vmatprep.subr.bf16.mxu0 0
        %1355 = vmatpush1.bf16.msra.mxu0 %v1254
        %1356 = vmatprep.subr.bf16.mxu0 0
        %1357 = vmatpush1.bf16.msra.mxu0 0
        %1358 = vmatprep.subr.bf16.mxu0 0
        %1359 = vmatpush1.bf16.msra.mxu0 0
        %1360 = vmatprep.subr.bf16.mxu0 0
        %1361 = vmatpush1.bf16.msra.mxu0 0
        %1362 = vmatprep.subr.bf16.mxu0 0
        %1363 = vmatpush1.bf16.msra.mxu0 0
        %1364 = vmatprep.subr.bf16.mxu0 0
        %1365 = vmatpush1.bf16.msra.mxu0 0
        %1366 = vmatprep.subr.bf16.mxu0 0
        %1367 = vmatpush1.bf16.msra.mxu0 0
        %1368 = vmatprep.subr.bf16.mxu0 0
        %1369 = vmatpush1.bf16.msra.mxu0 0
        %1370 = vmatprep.subr.bf16.mxu0 0
        %1371 = vmatpush1.bf16.msra.mxu0 0
        %1372 = vmatprep.subr.bf16.mxu0 0
        %1373 = vmatpush1.bf16.msra.mxu0 0
        %1374 = vmatprep.subr.bf16.mxu0 0
        %1375 = vmatpush1.bf16.msra.mxu0 0
        %1376 = vmatprep.subr.bf16.mxu0 0
        %1377 = vmatpush1.bf16.msra.mxu0 0
        %1378 = vmatprep.subr.bf16.mxu0 0
        %1379 = vmatpush1.bf16.msra.mxu0 0
        %1380 = vmatprep.mubr.bf16.mxu0 0
        %1381 = vmatmul.mubr.bf16.gmra.mrb[0].mxu0 %v1343
        %v1382 = vpop.f32.mrb[0].mxu0
        %v1383 = vadd.f32 %v1318, %v1382
        %v1384 = vpop.f32.mrb[0].mxu0
        %v1385 = vpop.f32.mrb[0].mxu0
        %v1386 = vadd.f32 %v1321, %v1385
        %v1387 = vpop.f32.mrb[0].mxu0
        %1388 = vmatprep.mubr.bf16.mxu0 0
        %1389 = vmatmul.mubr.bf16.gmra.mrb[0].mxu0 %v1346
        %v1390 = vpop.f32.mrb[0].mxu0
        %v1391 = vadd.f32 %v1326, %v1390
        %v1392 = vpop.f32.mrb[0].mxu0
        %v1393 = vpop.f32.mrb[0].mxu0
        %v1394 = vadd.f32 %v1329, %v1393
        %v1395 = vpop.f32.mrb[0].mxu0
        %1396 = vdwg.mxu0
        %v1397 = vrcp.pop %v1250
        %v1398 = vmul.f32 %v1383, %v1397
        %v1399 = vmul.f32 %v1386, %v1397
        %v1400 = vmul.f32 %v1391, %v1397
        %v1401 = vmul.f32 %v1394, %v1397
        %s1402 = scalar_lea.vmem %s333, 16 [#allocation3]
        %v1403 = vld [vmem:[%s1402] sm:$0xf]
        %v1404 = vld [vmem:[%s1402 + $0x4] sm:$0xf]
        %v1405 = vld [vmem:[%s1402 + $0x8] sm:$0xf]
        %v1406 = vld [vmem:[%s1402 + $0xc] sm:$0xf]
        %v1407 = vunpack.c.l.bf16 %v1403
        %v1408 = vunpack.c.l.bf16 %v1404
        %v1409 = vunpack.c.l.bf16 %v1405
        %v1410 = vunpack.c.l.bf16 %v1406
        %v1411 = vadd.f32 %v1407, %v1398
        %v1412 = vadd.f32 %v1408, %v1399
        %v1413 = vadd.f32 %v1409, %v1400
        %v1414 = vadd.f32 %v1410, %v1401
        %v1415 = vsel %vm610, %v1411, 0.0
        %1416 = vadd.xlane.f32.xlu0 %v1415
        %v1417 = vpop.xlane.xlu0 %1416
        %v1418 = vsel %vm610, %v1412, 0.0
        %1419 = vadd.xlane.f32.xlu0 %v1418
        %v1420 = vpop.xlane.xlu0 %1419
        %v1421 = vsel %vm610, %v1413, 0.0
        %1422 = vadd.xlane.f32.xlu0 %v1421
        %v1423 = vpop.xlane.xlu0 %1422
        %v1424 = vsel %vm610, %v1414, 0.0
        %1425 = vadd.xlane.f32.xlu0 %v1424
        %v1426 = vpop.xlane.xlu0 %1425
        %v1427 = vmul.f32 %v1417, %v909
        %v1428 = vmul.f32 %v1420, %v909
        %v1429 = vmul.f32 %v1423, %v909
        %v1430 = vmul.f32 %v1426, %v909
        %v1431 = vsub.f32 %v1411, %v1427
        %v1432 = vsub.f32 %v1412, %v1428
        %v1433 = vsub.f32 %v1413, %v1429
        %v1434 = vsub.f32 %v1414, %v1430
        %v1435 = vmul.f32 %v1431, %v1431
        %v1436 = vmul.f32 %v1432, %v1432
        %v1437 = vmul.f32 %v1433, %v1433
        %v1438 = vmul.f32 %v1434, %v1434
        %v1439 = vsel %vm610, %v1435, 0.0
        %1440 = vadd.xlane.f32.xlu0 %v1439
        %v1441 = vpop.xlane.xlu0 %1440
        %v1442 = vsel %vm610, %v1436, 0.0
        %1443 = vadd.xlane.f32.xlu0 %v1442
        %v1444 = vpop.xlane.xlu0 %1443
        %v1445 = vsel %vm610, %v1437, 0.0
        %1446 = vadd.xlane.f32.xlu0 %v1445
        %v1447 = vpop.xlane.xlu0 %1446
        %v1448 = vsel %vm610, %v1438, 0.0
        %1449 = vadd.xlane.f32.xlu0 %v1448
        %v1450 = vpop.xlane.xlu0 %1449
        %v1451 = vmul.f32 %v1441, %v909
        %v1452 = vmul.f32 %v1444, %v909
        %v1453 = vmul.f32 %v1447, %v909
        %v1454 = vmul.f32 %v1450, %v909
        %v1455 = vadd.f32 %v1451, 1e-05
        %v1456 = vadd.f32 %v1452, 1e-05
        %v1457 = vadd.f32 %v1453, 1e-05
        %v1458 = vadd.f32 %v1454, 1e-05
        %v1459 = vrsqrt.pop %v1455
        %v1460 = vrsqrt.pop %v1456
        %v1461 = vrsqrt.pop %v1457
        %v1462 = vrsqrt.pop %v1458
        %v1463 = vmul.f32 %v1431, %v1459
        %v1464 = vmul.f32 %v1432, %v1460
        %v1465 = vmul.f32 %v1433, %v1461
        %v1466 = vmul.f32 %v1434, %v1462
        %v1467 = vpack.c.bf16 %v1464, %v1463
        %v1468 = vpack.c.bf16 %v1466, %v1465
        %v1471 = vunpack.c.l.b16 %v1467
        %v1472 = vunpack.c.h.b16 %v1467
        %v1473 = vunpack.c.l.b16 %v1468
        %v1474 = vunpack.c.h.b16 %v1468
        %v1475 = vpack.c.b16 %v1471, %v1471
        %v1476 = vpack.c.b16 %v1472, %v1472
        %v1477 = vpack.c.b16 %v1473, %v1473
        %v1478 = vpack.c.b16 %v1474, %v1474
        %s1483 = scalar_lea.vmem %s362, 16 [#allocation4]
        %1484 = vst.msk [vmem:[%s1483] sm:$0xf] %vm966, %v1475
        %1485 = vst.msk [vmem:[%s1483 + $0x4] sm:$0xf] %vm966, %v1476
        %1486 = vst.msk [vmem:[%s1483 + $0x8] sm:$0xf] %vm966, %v1477
        %1487 = vst.msk [vmem:[%s1483 + $0xc] sm:$0xf] %vm966, %v1478
        %s1488 = sand.u32 %s119, 1
        %s1489 = scalar_lea.sflag [#allocation5], %s1488
        %s1490 = sand.u32 %s119, 1
        %s1491 = smul.addr %s1490, 32
        %s1492 = scalar_lea.vmem [#allocation4], %s1491
        // Predicated region
        $region115: #{tpu_custom_call.1} parent=105 // pred_check
          %p1493 = pneg %p129
        $region116: #{tpu_custom_call.1} parent=105 // pred_check_branch
          %1495 = sbr.rel (%p1493) target = $region118
        $region117: #{tpu_custom_call.1} parent=105 // pred_region
          #allocation7 [shape = 'u32[6]{0}', space=smem, size = 0x18, scoped, tag = 'DMA stride descriptor']
          %s1496 = smul.u32 2, %s22
          %s1498 = ssub.s32 512, 512
          %1499 = vsyncadd %s1489, %s1498
          %s1500 = smul.addr %s21, 4
          %s1501 = smul.addr %s1496, 8
          %s1502 = sadd.s32 %s1500, %s1501
          %s1503 = smul.addr %s1502, 64
          %s1504 = scalar_lea.hbm %s3, %s1503
          %s1506 = sshll.u32 1, 14
          %s1507 = sxor.u32 4294967295, %s1506
          %s1510 = sshll.u32 7, 18
          %s1511 = sxor.u32 4294967295, %s1510
          %s1512 = sand.u32 0, %s1511
          %s1514 = sor.u32 %s1512, 0
          %s1516 = sshll.u32 3, 24
          %s1517 = sxor.u32 4294967295, %s1516
          %s1518 = sand.u32 %s1514, %s1517
          %s1520 = sor.u32 %s1518, 0
          %s1521 = sshll.u32 %s1492, 4
          %s1522 = int_to_ptr.vmem [resolvable:$true] %s1521
          %1528 = sst [smem:[#allocation7]] 256
          %s1529 = scalar_lea.smem [#allocation7], 1
          %1530 = sst [smem:[%s1529]] 512
          %s1531 = scalar_lea.smem [#allocation7], 2
          %1532 = sst [smem:[%s1531]] 4
          %s1533 = scalar_lea.smem [#allocation7], 3
          %1534 = sst [smem:[%s1533]] 64
          %s1535 = scalar_lea.smem [#allocation7], 4
          %1536 = sst [smem:[%s1535]] 64
          %s1537 = scalar_lea.smem [#allocation7], 5
          %1538 = sst [smem:[%s1537]] 4
          %1540 = dma.general %s1522, 512, %s1504, %s1489, [#allocation6], [#allocation7], %s1520, 0
        $region118: #{tpu_custom_call.1} parent=105 // pred_fallthru
          _
      $region106: #{tpu_custom_call.1} parent=5 // pred_fallthru
        _
      %p1541 = scmp.le.s32.totalorder 2, %s12
      // Predicated region
      $region119: #{tpu_custom_call.1} parent=5 // pred_check
        %p1542 = pneg %p1541
      $region120: #{tpu_custom_call.1} parent=5 // pred_check_branch
        %1544 = sbr.rel (%p1542) target = $region122
      $region121: #{tpu_custom_call.1} parent=5 // pred_region
        %s1545 = ssub.s32 %s12, 2
        // Predicated region
        $region123: #{tpu_custom_call.1} parent=121 // pred_check
          %p1546 = pneg %p135
        $region124: #{tpu_custom_call.1} parent=121 // pred_check_branch
          %1548 = sbr.rel (%p1546) target = $region126
        $region125: #{tpu_custom_call.1} parent=121 // pred_region
          %s1549 = sand.u32 %s120, 1
          %s1550 = scalar_lea.sflag [#allocation5], %s1549
          %s1551 = sand.u32 %s120, 1
          %s1552 = smul.addr %s1551, 32
          %s1553 = scalar_lea.vmem [#allocation4], %s1552
          %1554 = dma.done %s1550, 512
        $region126: #{tpu_custom_call.1} parent=121 // pred_fallthru
          _
      $region122: #{tpu_custom_call.1} parent=5 // pred_fallthru
        _
    $region6: #{tpu_custom_call.1} parent=1 // loop_footer
      %s16 = sadd.s32 1, %s12
    $region7: #{tpu_custom_call.1} parent=1 // loop_footer_branch
      %11 = sbr.rel target = $region3
    $region8: #{tpu_custom_call.1} parent=1 // loop_exit
      _
    %1555 = vsyncpa [#allocation5], 1
    %s1556 = scalar_lea.sflag [#allocation5], 1
    %1557 = vsyncpa %s1556, 1

</llo_original>
